<compile_context>
chip_gen: v7x
topology: tpu7x:2x2x1
jax: 0.10.0
libtpu: 0.0.40
codegen_flags: <defaults>
</compile_context>

<pallas_src>
import functools
import math

import jax
import jax.numpy as jnp
from jax.experimental import pallas as pl
from jax.experimental.pallas import tpu as pltpu


LN_EPS = 1e-12

# Scoped-VMEM request: above v5e/v6e defaults (the fused blocks at real BERT
# sizes need ~20+ MiB) and safely below v7x's 64 MiB physical VMEM.
VMEM_LIMIT_BYTES = 32 * 1024 * 1024


def _params(sem):
    return pltpu.CompilerParams(dimension_semantics=sem,
                                vmem_limit_bytes=VMEM_LIMIT_BYTES)


def _row_tile(m, cap=512):
    """Largest row tile: whole slab if small, else a big multiple of 8.

    TODO(synk): bump cap to 1024 on v6e (128 MiB VMEM); keep <=512 on v7x.
    """
    if m <= cap:
        return m
    for t in (512, 256, 128, 64, 32, 16, 8):
        if t <= cap and m % t == 0:
            return t
    return m


def _col_tile(n, cap=512):
    """Tile of the FFN intermediate dim (multiple of 128 at real sizes)."""
    if n <= cap:
        return n
    for t in (512, 384, 256, 128):
        if t <= cap and n % t == 0:
            return t
    return n


def _layernorm(y, g, b, eps):
    mean = jnp.mean(y, axis=-1, keepdims=True)
    yc = y - mean
    var = jnp.mean(yc * yc, axis=-1, keepdims=True)
    inv = jax.lax.rsqrt(var + eps)
    return yc * inv * g + b


# ----------------------------- Pallas kernels ------------------------------

def _emb_layernorm_kernel(x_ref, g_ref, b_ref, o_ref, *, eps):
    x = x_ref[...].astype(jnp.float32)
    o_ref[...] = _layernorm(x, g_ref[...], b_ref[...], eps).astype(o_ref.dtype)


def _attn_block_kernel(x_ref, mask_ref, wqkv_ref, bqkv_ref, wo_ref, bo_ref,
                       g_ref, b_ref, o_ref, ctx_ref, *, num_heads, eps):
    """Fused: QKV proj -> multi-head attention -> output proj -> +res -> LN.

    One grid step == one batch element; all heads handled here.  Per-head
    context vectors land in column slices of a bf16 VMEM scratch (bounds vreg
    liveness), then ONE (S,H)@(H,H) output projection runs with full K = H.
    """
    S, H = x_ref.shape
    dh = H // num_heads
    scale = 1.0 / math.sqrt(dh)

    x_bf = x_ref[...]                                   # (S, H) bf16 activations
    x_f32 = x_bf.astype(jnp.float32)                    # residual path

    # Fused QKV projection: one MXU pass with N = 3H, f32 accumulation, then a
    # single cast of the whole slab to bf16.
    qkv = (jnp.dot(x_bf, wqkv_ref[...], preferred_element_type=jnp.float32)
           + bqkv_ref[...]).astype(jnp.bfloat16)        # (S, 3H)

    mask = mask_ref[0]                                  # (1, S) additive key mask

    # TODO(synk): per-head slices at dh granularity are lane-misaligned at real
    # sizes; see header TODO (pad dh / heads on a grid axis).
    for h in range(num_heads):                          # static unroll (small nh)
        q = qkv[:, h * dh:(h + 1) * dh]                             # (S, dh)
        k = qkv[:, H + h * dh:H + (h + 1) * dh]                     # (S, dh)
        v = qkv[:, 2 * H + h * dh:2 * H + (h + 1) * dh]             # (S, dh)

        s = jnp.einsum("qd,kd->qk", q, k,
                       preferred_element_type=jnp.float32) * scale + mask
        s = s - jnp.max(s, axis=-1, keepdims=True)
        p = jnp.exp(s)                                  # f32 EUP (v5e-safe)
        p = p * pl.reciprocal(jnp.sum(p, axis=-1, keepdims=True), approx=True)

        ctx = jnp.einsum("qk,kd->qd", p.astype(jnp.bfloat16), v,
                         preferred_element_type=jnp.float32)        # (S, dh)
        ctx_ref[:, h * dh:(h + 1) * dh] = ctx.astype(jnp.bfloat16)

    # Single output projection over all heads (full MXU K-fill), + residual, LN.
    y = (jnp.dot(ctx_ref[...], wo_ref[...], preferred_element_type=jnp.float32)
         + bo_ref[...] + x_f32)
    o_ref[...] = _layernorm(y, g_ref[...], b_ref[...], eps).astype(o_ref.dtype)


def _ffn_block_kernel(x_ref, wi_ref, bi_ref, wo_ref, bo_ref, g_ref, b_ref,
                      o_ref, acc_ref, *, eps):
    """Fused FFN, K-tiled over the intermediate dim I (grid axis 1, 'arbitrary').

    Each step: x @ wi[:, k-tile] -> GELU -> @ wo[k-tile, :] accumulated in an
    f32 VMEM scratch; residual + LayerNorm on the last k step.
    """
    ki = pl.program_id(1)

    @pl.when(ki == 0)
    def _():
        acc_ref[...] = jnp.zeros_like(acc_ref)

    x_bf = x_ref[...]                                   # (tm, H) bf16, resident
    h1 = jnp.dot(x_bf, wi_ref[...],
                 preferred_element_type=jnp.float32) + bi_ref[...]
    # TODO(synk): HF BERT uses exact erf-GELU; tanh approximation used here.
    c = math.sqrt(2.0 / math.pi)
    h1 = 0.5 * h1 * (1.0 + jnp.tanh(c * (h1 + 0.044715 * h1 * h1 * h1)))
    acc_ref[...] += jnp.dot(h1.astype(jnp.bfloat16), wo_ref[...],
                            preferred_element_type=jnp.float32)

    @pl.when(ki == pl.num_programs(1) - 1)
    def _():
        y = acc_ref[...] + bo_ref[...] + x_ref[...].astype(jnp.float32)
        o_ref[...] = _layernorm(y, g_ref[...], b_ref[...], eps).astype(o_ref.dtype)


def _pooler_kernel(x_ref, w_ref, b_ref, o_ref):
    y = jnp.dot(x_ref[...], w_ref[...],
                preferred_element_type=jnp.float32) + b_ref[...]
    o_ref[...] = jnp.tanh(y).astype(o_ref.dtype)


# ----------------------------- kernel wrappers ------------------------------

def emb_layernorm(x, gamma, beta, eps=LN_EPS):
    M, H = x.shape
    tm = _row_tile(M)
    row = pl.BlockSpec((tm, H), lambda i: (i, 0))
    vec = pl.BlockSpec((1, H), lambda i: (0, 0))
    return pl.pallas_call(
        functools.partial(_emb_layernorm_kernel, eps=eps),
        out_shape=jax.ShapeDtypeStruct((M, H), jnp.bfloat16),   # bf16 activations
        grid=(M // tm,),
        in_specs=[row, vec, vec],
        out_specs=row,
        compiler_params=_params(("parallel",)),
    )(x, gamma.reshape(1, H), beta.reshape(1, H))


def attention_block(x, add_mask, wqkv, bqkv, wo, bo, gamma, beta, *,
                    batch, seq, num_heads, eps=LN_EPS):
    M, H = x.shape
    assert M == batch * seq
    kernel = functools.partial(_attn_block_kernel, num_heads=num_heads, eps=eps)
    row = pl.BlockSpec((seq, H), lambda i: (i, 0))
    vec = pl.BlockSpec((1, H), lambda i: (0, 0))
    # TODO(synk): on v7x add a second 'parallel' q-row grid axis (flash-style)
    # so both TensorCores stay busy at small batch.
    return pl.pallas_call(
        kernel,
        out_shape=jax.ShapeDtypeStruct((M, H), jnp.bfloat16),   # bf16 activations
        grid=(batch,),
        in_specs=[
            row,                                               # hidden rows (bf16)
            pl.BlockSpec((1, 1, seq), lambda i: (i, 0, 0)),    # rank-1 key mask
            pl.BlockSpec((H, 3 * H), lambda i: (0, 0)),        # fused QKV weight
            pl.BlockSpec((1, 3 * H), lambda i: (0, 0)),
            pl.BlockSpec((H, H), lambda i: (0, 0)),            # output proj
            vec, vec, vec,
        ],
        out_specs=row,
        scratch_shapes=[pltpu.VMEM((seq, H), jnp.bfloat16)],   # per-head ctx slab
        compiler_params=_params(("parallel",)),
    )(x, add_mask, wqkv, bqkv.reshape(1, 3 * H), wo, bo.reshape(1, H),
      gamma.reshape(1, H), beta.reshape(1, H))


def ffn_block(x, wi, bi, wo2, bo2, gamma, beta, eps=LN_EPS):
    M, H = x.shape
    I = wi.shape[1]
    tm = _row_tile(M)
    ti = _col_tile(I)
    row = pl.BlockSpec((tm, H), lambda i, k: (i, 0))
    vec = pl.BlockSpec((1, H), lambda i, k: (0, 0))
    return pl.pallas_call(
        functools.partial(_ffn_block_kernel, eps=eps),
        out_shape=jax.ShapeDtypeStruct((M, H), jnp.bfloat16),   # bf16 activations
        grid=(M // tm, I // ti),                                # reduction axis last
        in_specs=[
            row,                                          # resident across k
            pl.BlockSpec((H, ti), lambda i, k: (0, k)),   # wi k-tile
            pl.BlockSpec((1, ti), lambda i, k: (0, k)),   # bi k-tile
            pl.BlockSpec((ti, H), lambda i, k: (k, 0)),   # wo k-tile
            vec, vec, vec,
        ],
        out_specs=row,                                    # revisited across k
        scratch_shapes=[pltpu.VMEM((tm, H), jnp.float32)],
        compiler_params=_params(("parallel", "arbitrary")),
    )(x, wi, bi.reshape(1, I), wo2, bo2.reshape(1, H),
      gamma.reshape(1, H), beta.reshape(1, H))


def pooler(x, w, b):
    B, H = x.shape
    return pl.pallas_call(
        _pooler_kernel,
        out_shape=jax.ShapeDtypeStruct((B, H), jnp.float32),
        grid=(1,),
        in_specs=[pl.BlockSpec((B, H), lambda i: (0, 0)),
                  pl.BlockSpec((H, H), lambda i: (0, 0)),
                  pl.BlockSpec((1, H), lambda i: (0, 0))],
        out_specs=pl.BlockSpec((B, H), lambda i: (0, 0)),
        compiler_params=_params(("parallel",)),
    )(x, w, b.reshape(1, H))


# ----------------------------- Model (glue) --------------------------------

CFG = dict(
    vocab=100,
    max_pos=32,
    type_vocab=2,
    hidden=32,
    heads=2,
    intermediate=64,
    layers=2,
)


def init_params(key, cfg):
    H, I = cfg["hidden"], cfg["intermediate"]
    keys = iter(jax.random.split(key, 64))
    nrm = lambda shape: 0.02 * jax.random.normal(next(keys), shape, jnp.float32)
    bf = jnp.bfloat16
    params = {
        "word_emb": nrm((cfg["vocab"], H)),
        "pos_emb": nrm((cfg["max_pos"], H)),
        "type_emb": nrm((cfg["type_vocab"], H)),
        "emb_ln_g": jnp.ones((H,), jnp.float32),
        "emb_ln_b": jnp.zeros((H,), jnp.float32),
        "pool_w": nrm((H, H)).astype(bf),          # MXU operand -> bf16
        "pool_b": jnp.zeros((H,), jnp.float32),
        "layers": [],
    }
    for _ in range(cfg["layers"]):
        wq, wk, wv = nrm((H, H)), nrm((H, H)), nrm((H, H))
        params["layers"].append({
            # Q/K/V fused into one (H, 3H) weight; matmul weights stored bf16.
            "wqkv": jnp.concatenate([wq, wk, wv], axis=1).astype(bf),
            "bqkv": jnp.zeros((3 * H,), jnp.float32),
            "wo": nrm((H, H)).astype(bf), "bo": jnp.zeros((H,), jnp.float32),
            "ln1_g": jnp.ones((H,), jnp.float32),
            "ln1_b": jnp.zeros((H,), jnp.float32),
            "wi": nrm((H, I)).astype(bf), "bi": jnp.zeros((I,), jnp.float32),
            "wo2": nrm((I, H)).astype(bf), "bo2": jnp.zeros((H,), jnp.float32),
            "ln2_g": jnp.ones((H,), jnp.float32),
            "ln2_b": jnp.zeros((H,), jnp.float32),
        })
    return params


def bert_encoder_forward(params, input_ids, attention_mask=None,
                         token_type_ids=None, cfg=CFG):
    B, S = input_ids.shape
    H, nh = cfg["hidden"], cfg["heads"]
    if attention_mask is None:
        attention_mask = jnp.ones((B, S), jnp.int32)
    if token_type_ids is None:
        token_type_ids = jnp.zeros((B, S), jnp.int32)

    # Embedding gathers stay in XLA (glue); LayerNorm is a Pallas kernel.
    emb = (params["word_emb"][input_ids]
           + params["pos_emb"][jnp.arange(S)][None, :, :]
           + params["type_emb"][token_type_ids])
    h = emb_layernorm(emb.reshape(B * S, H), params["emb_ln_g"],
                      params["emb_ln_b"])

    # Rank-1 additive key mask (HF convention: large-negative-of-dtype).
    neg = jnp.finfo(jnp.float32).min
    add_mask = ((1.0 - attention_mask.astype(jnp.float32)) * neg).reshape(B, 1, S)

    for lp in params["layers"]:
        h = attention_block(h, add_mask, lp["wqkv"], lp["bqkv"], lp["wo"],
                            lp["bo"], lp["ln1_g"], lp["ln1_b"],
                            batch=B, seq=S, num_heads=nh)
        h = ffn_block(h, lp["wi"], lp["bi"], lp["wo2"], lp["bo2"],
                      lp["ln2_g"], lp["ln2_b"])

    # Pooler: tanh(W_p @ hidden[:, 0] + b_p)  ->  (B, H)
    cls = h.reshape(B, S, H)[:, 0, :]
    return pooler(cls, params["pool_w"], params["pool_b"])


# --------------------------------- main -------------------------------------

if __name__ == "__main__":
    key = jax.random.PRNGKey(0)
    pkey, ikey = jax.random.split(key)

    B, S = 2, 8
    params = init_params(pkey, CFG)
    input_ids = jax.random.randint(ikey, (B, S), 0, CFG["vocab"], dtype=jnp.int32)
    attention_mask = jnp.array(
        [[1, 1, 1, 1, 1, 1, 1, 1],
         [1, 1, 1, 1, 1, 1, 0, 0]], dtype=jnp.int32)
    token_type_ids = jnp.zeros((B, S), jnp.int32)

    fwd = jax.jit(bert_encoder_forward)
    pooled = fwd(params, input_ids, attention_mask, token_type_ids)
    pooled = jax.block_until_ready(pooled)
    assert pooled.shape == (B, CFG["hidden"]) and pooled.dtype == jnp.float32
    assert bool(jnp.all(jnp.isfinite(pooled)))
    print("KERNEL_OK")
</pallas_src>

<mosaic_0001>
module attributes {stable_mosaic.version = 11 : i64} {
  func.func @_emb_layernorm_kernel(%arg0: i32, %arg1: memref<16x32xf32, #tpu.memory_space<vmem>>, %arg2: memref<1x32xf32, #tpu.memory_space<vmem>>, %arg3: memref<1x32xf32, #tpu.memory_space<vmem>>, %arg4: memref<16x32xbf16, #tpu.memory_space<vmem>>) attributes {dimension_semantics = [#tpu.dimension_semantics<parallel>], iteration_bounds = array<i64: 1>, scalar_prefetch = 0 : i64, scratch_operands = 0 : i64, tpu.core_type = #tpu.core_type<tc>, window_params = [{transform_indices = @transform_0, window_bounds = array<i64: 16, 32>}, {pipeline_mode = #tpu.pipeline_mode<synchronous>, transform_indices = @transform_1, window_bounds = array<i64: 1, 32>}, {pipeline_mode = #tpu.pipeline_mode<synchronous>, transform_indices = @transform_2, window_bounds = array<i64: 1, 32>}, {transform_indices = @transform_3, window_bounds = array<i64: 16, 32>}]} {
    %c0 = arith.constant 0 : index
    %c0_0 = arith.constant 0 : index
    %0 = vector.load %arg1[%c0, %c0_0] : memref<16x32xf32, #tpu.memory_space<vmem>>, vector<16x32xf32>
    %c0_1 = arith.constant 0 : index
    %c0_2 = arith.constant 0 : index
    %1 = vector.load %arg2[%c0_1, %c0_2] : memref<1x32xf32, #tpu.memory_space<vmem>>, vector<1x32xf32>
    %c0_3 = arith.constant 0 : index
    %c0_4 = arith.constant 0 : index
    %2 = vector.load %arg3[%c0_3, %c0_4] : memref<1x32xf32, #tpu.memory_space<vmem>>, vector<1x32xf32>
    %cst = arith.constant dense<0.000000e+00> : vector<16xf32>
    %3 = vector.multi_reduction <add>, %0, %cst [1] : vector<16x32xf32> to vector<16xf32>
    %4 = vector.shape_cast %3 : vector<16xf32> to vector<16x1xf32>
    %cst_5 = arith.constant 3.200000e+01 : f32
    %5 = vector.broadcast %cst_5 : f32 to vector<16x1xf32>
    %6 = arith.divf %4, %5 : vector<16x1xf32>
    %7 = vector.broadcast %6 : vector<16x1xf32> to vector<16x32xf32>
    %8 = arith.subf %0, %7 : vector<16x32xf32>
    %9 = arith.mulf %8, %8 : vector<16x32xf32>
    %cst_6 = arith.constant dense<0.000000e+00> : vector<16xf32>
    %10 = vector.multi_reduction <add>, %9, %cst_6 [1] : vector<16x32xf32> to vector<16xf32>
    %11 = vector.shape_cast %10 : vector<16xf32> to vector<16x1xf32>
    %cst_7 = arith.constant 3.200000e+01 : f32
    %12 = vector.broadcast %cst_7 : f32 to vector<16x1xf32>
    %13 = arith.divf %11, %12 : vector<16x1xf32>
    %cst_8 = arith.constant 9.99999996E-13 : f32
    %14 = vector.broadcast %cst_8 : f32 to vector<16x1xf32>
    %15 = arith.addf %13, %14 : vector<16x1xf32>
    %16 = math.rsqrt %15 : vector<16x1xf32>
    %17 = vector.broadcast %16 : vector<16x1xf32> to vector<16x32xf32>
    %18 = arith.mulf %8, %17 : vector<16x32xf32>
    %19 = vector.broadcast %1 : vector<1x32xf32> to vector<16x32xf32>
    %20 = arith.mulf %18, %19 : vector<16x32xf32>
    %21 = vector.broadcast %2 : vector<1x32xf32> to vector<16x32xf32>
    %22 = arith.addf %20, %21 : vector<16x32xf32>
    %23 = arith.truncf %22 : vector<16x32xf32> to vector<16x32xbf16>
    %c0_9 = arith.constant 0 : index
    %c0_10 = arith.constant 0 : index
    %24 = vector.load %arg4[%c0_9, %c0_10] : memref<16x32xbf16, #tpu.memory_space<vmem>>, vector<16x32xbf16>
    tpu.vector_store %arg4[%c0_9, %c0_10], %23 {strides = array<i32>} : memref<16x32xbf16, #tpu.memory_space<vmem>>, vector<16x32xbf16>,
    return
  }
  func.func @transform_0(%arg0: i32) -> (i32, i32) {
    %c0_i32 = arith.constant 0 : i32
    %c0_i32_0 = arith.constant 0 : i32
    return %arg0, %c0_i32 : i32, i32
  }
  func.func @transform_1(%arg0: i32) -> (i32, i32) {
    %c0_i32 = arith.constant 0 : i32
    %c0_i32_0 = arith.constant 0 : i32
    %c0_i32_1 = arith.constant 0 : i32
    return %c0_i32, %c0_i32_0 : i32, i32
  }
  func.func @transform_2(%arg0: i32) -> (i32, i32) {
    %c0_i32 = arith.constant 0 : i32
    %c0_i32_0 = arith.constant 0 : i32
    %c0_i32_1 = arith.constant 0 : i32
    return %c0_i32, %c0_i32_0 : i32, i32
  }
  func.func @transform_3(%arg0: i32) -> (i32, i32) {
    %c0_i32 = arith.constant 0 : i32
    %c0_i32_0 = arith.constant 0 : i32
    return %arg0, %c0_i32 : i32, i32
  }
}

module attributes {stable_mosaic.version = 11 : i64} {
  func.func @_attn_block_kernel(%arg0: i32, %arg1: memref<8x32xbf16, #tpu.memory_space<vmem>>, %arg2: memref<1x1x8xf32, #tpu.memory_space<vmem>>, %arg3: memref<32x96xbf16, #tpu.memory_space<vmem>>, %arg4: memref<1x96xf32, #tpu.memory_space<vmem>>, %arg5: memref<32x32xbf16, #tpu.memory_space<vmem>>, %arg6: memref<1x32xf32, #tpu.memory_space<vmem>>, %arg7: memref<1x32xf32, #tpu.memory_space<vmem>>, %arg8: memref<1x32xf32, #tpu.memory_space<vmem>>, %arg9: memref<8x32xbf16, #tpu.memory_space<vmem>>, %arg10: memref<8x32xbf16, #tpu.memory_space<vmem>>) attributes {dimension_semantics = [#tpu.dimension_semantics<parallel>], iteration_bounds = array<i64: 2>, scalar_prefetch = 0 : i64, scratch_operands = 1 : i64, tpu.core_type = #tpu.core_type<tc>, window_params = [{transform_indices = @transform_0, window_bounds = array<i64: 8, 32>}, {transform_indices = @transform_1, window_bounds = array<i64: 1, 1, 8>}, {pipeline_mode = #tpu.pipeline_mode<synchronous>, transform_indices = @transform_2, window_bounds = array<i64: 32, 96>}, {pipeline_mode = #tpu.pipeline_mode<synchronous>, transform_indices = @transform_3, window_bounds = array<i64: 1, 96>}, {pipeline_mode = #tpu.pipeline_mode<synchronous>, transform_indices = @transform_4, window_bounds = array<i64: 32, 32>}, {pipeline_mode = #tpu.pipeline_mode<synchronous>, transform_indices = @transform_5, window_bounds = array<i64: 1, 32>}, {pipeline_mode = #tpu.pipeline_mode<synchronous>, transform_indices = @transform_6, window_bounds = array<i64: 1, 32>}, {pipeline_mode = #tpu.pipeline_mode<synchronous>, transform_indices = @transform_7, window_bounds = array<i64: 1, 32>}, {transform_indices = @transform_8, window_bounds = array<i64: 8, 32>}]} {
    %c0 = arith.constant 0 : index
    %c0_0 = arith.constant 0 : index
    %0 = vector.load %arg1[%c0, %c0_0] : memref<8x32xbf16, #tpu.memory_space<vmem>>, vector<8x32xbf16>
    %1 = arith.extf %0 : vector<8x32xbf16> to vector<8x32xf32>
    %c0_1 = arith.constant 0 : index
    %c0_2 = arith.constant 0 : index
    %2 = vector.load %arg3[%c0_1, %c0_2] : memref<32x96xbf16, #tpu.memory_space<vmem>>, vector<32x96xbf16>
    %cst = arith.constant dense<0.000000e+00> : vector<8x96xf32>
    %3 = tpu.matmul %0, %2, %cst {dimension_numbers = #tpu.dot_dimension_numbers<[1], [0], [0], [1], [0, 0, 1, 1], [], []>} : vector<8x32xbf16>, vector<32x96xbf16>, vector<8x96xf32> -> vector<8x96xf32>
    %c0_3 = arith.constant 0 : index
    %c0_4 = arith.constant 0 : index
    %4 = vector.load %arg4[%c0_3, %c0_4] : memref<1x96xf32, #tpu.memory_space<vmem>>, vector<1x96xf32>
    %5 = vector.broadcast %4 : vector<1x96xf32> to vector<8x96xf32>
    %6 = arith.addf %3, %5 : vector<8x96xf32>
    %7 = arith.truncf %6 : vector<8x96xf32> to vector<8x96xbf16>
    %c0_5 = arith.constant 0 : index
    %c0_6 = arith.constant 0 : index
    %c0_7 = arith.constant 0 : index
    %8 = vector.load %arg2[%c0_5, %c0_6, %c0_7] : memref<1x1x8xf32, #tpu.memory_space<vmem>>, vector<1x1x8xf32>
    %9 = vector.shape_cast %8 : vector<1x1x8xf32> to vector<1x8xf32>
    %10 = vector.extract_strided_slice %7 {offsets = [0, 0], sizes = [8, 16], strides = [1, 1]} : vector<8x96xbf16> to vector<8x16xbf16>
    %11 = vector.extract_strided_slice %7 {offsets = [0, 32], sizes = [8, 16], strides = [1, 1]} : vector<8x96xbf16> to vector<8x16xbf16>
    %12 = vector.extract_strided_slice %7 {offsets = [0, 64], sizes = [8, 16], strides = [1, 1]} : vector<8x96xbf16> to vector<8x16xbf16>
    "tpu.trace_start"() <{level = 10 : i32, message = "qd,kd->qk"}> : () -> ()
    %cst_8 = arith.constant dense<0.000000e+00> : vector<8x8xf32>
    %13 = tpu.matmul %10, %11, %cst_8 {dimension_numbers = #tpu.dot_dimension_numbers<[1], [1], [0], [0], [0, 0, 1, 0], [], []>} : vector<8x16xbf16>, vector<8x16xbf16>, vector<8x8xf32> -> vector<8x8xf32>
    "tpu.trace_stop"() : () -> ()
    %cst_9 = arith.constant 2.500000e-01 : f32
    %14 = vector.broadcast %cst_9 : f32 to vector<8x8xf32>
    %15 = arith.mulf %13, %14 : vector<8x8xf32>
    %16 = vector.broadcast %9 : vector<1x8xf32> to vector<8x8xf32>
    %17 = arith.addf %15, %16 : vector<8x8xf32>
    %cst_10 = arith.constant dense<0xFF800000> : vector<8xf32>
    %18 = vector.multi_reduction <maximumf>, %17, %cst_10 [1] : vector<8x8xf32> to vector<8xf32>
    %19 = vector.shape_cast %18 : vector<8xf32> to vector<8x1xf32>
    %20 = vector.broadcast %19 : vector<8x1xf32> to vector<8x8xf32>
    %21 = arith.subf %17, %20 : vector<8x8xf32>
    %22 = math.exp %21 : vector<8x8xf32>
    %cst_11 = arith.constant dense<0.000000e+00> : vector<8xf32>
    %23 = vector.multi_reduction <add>, %22, %cst_11 [1] : vector<8x8xf32> to vector<8xf32>
    %24 = vector.shape_cast %23 : vector<8xf32> to vector<8x1xf32>
    %25 = tpu.reciprocal %24 {approx = true} : vector<8x1xf32> -> vector<8x1xf32>
    %26 = vector.broadcast %25 : vector<8x1xf32> to vector<8x8xf32>
    %27 = arith.mulf %22, %26 : vector<8x8xf32>
    %28 = arith.truncf %27 : vector<8x8xf32> to vector<8x8xbf16>
    "tpu.trace_start"() <{level = 10 : i32, message = "qk,kd->qd"}> : () -> ()
    %cst_12 = arith.constant dense<0.000000e+00> : vector<8x16xf32>
    %29 = tpu.matmul %28, %12, %cst_12 {dimension_numbers = #tpu.dot_dimension_numbers<[1], [0], [0], [1], [0, 0, 1, 1], [], []>} : vector<8x8xbf16>, vector<8x16xbf16>, vector<8x16xf32> -> vector<8x16xf32>
    "tpu.trace_stop"() : () -> ()
    %30 = arith.truncf %29 : vector<8x16xf32> to vector<8x16xbf16>
    %c0_13 = arith.constant 0 : index
    %c0_14 = arith.constant 0 : index
    %31 = vector.load %arg10[%c0_13, %c0_14] : memref<8x32xbf16, #tpu.memory_space<vmem>>, vector<8x16xbf16>
    tpu.vector_store %arg10[%c0_13, %c0_14], %30 {strides = array<i32>} : memref<8x32xbf16, #tpu.memory_space<vmem>>, vector<8x16xbf16>,
    %32 = vector.extract_strided_slice %7 {offsets = [0, 16], sizes = [8, 16], strides = [1, 1]} : vector<8x96xbf16> to vector<8x16xbf16>
    %33 = vector.extract_strided_slice %7 {offsets = [0, 48], sizes = [8, 16], strides = [1, 1]} : vector<8x96xbf16> to vector<8x16xbf16>
    %34 = vector.extract_strided_slice %7 {offsets = [0, 80], sizes = [8, 16], strides = [1, 1]} : vector<8x96xbf16> to vector<8x16xbf16>
    "tpu.trace_start"() <{level = 10 : i32, message = "qd,kd->qk"}> : () -> ()
    %cst_15 = arith.constant dense<0.000000e+00> : vector<8x8xf32>
    %35 = tpu.matmul %32, %33, %cst_15 {dimension_numbers = #tpu.dot_dimension_numbers<[1], [1], [0], [0], [0, 0, 1, 0], [], []>} : vector<8x16xbf16>, vector<8x16xbf16>, vector<8x8xf32> -> vector<8x8xf32>
    "tpu.trace_stop"() : () -> ()
    %cst_16 = arith.constant 2.500000e-01 : f32
    %36 = vector.broadcast %cst_16 : f32 to vector<8x8xf32>
    %37 = arith.mulf %35, %36 : vector<8x8xf32>
    %38 = vector.broadcast %9 : vector<1x8xf32> to vector<8x8xf32>
    %39 = arith.addf %37, %38 : vector<8x8xf32>
    %cst_17 = arith.constant dense<0xFF800000> : vector<8xf32>
    %40 = vector.multi_reduction <maximumf>, %39, %cst_17 [1] : vector<8x8xf32> to vector<8xf32>
    %41 = vector.shape_cast %40 : vector<8xf32> to vector<8x1xf32>
    %42 = vector.broadcast %41 : vector<8x1xf32> to vector<8x8xf32>
    %43 = arith.subf %39, %42 : vector<8x8xf32>
    %44 = math.exp %43 : vector<8x8xf32>
    %cst_18 = arith.constant dense<0.000000e+00> : vector<8xf32>
    %45 = vector.multi_reduction <add>, %44, %cst_18 [1] : vector<8x8xf32> to vector<8xf32>
    %46 = vector.shape_cast %45 : vector<8xf32> to vector<8x1xf32>
    %47 = tpu.reciprocal %46 {approx = true} : vector<8x1xf32> -> vector<8x1xf32>
    %48 = vector.broadcast %47 : vector<8x1xf32> to vector<8x8xf32>
    %49 = arith.mulf %44, %48 : vector<8x8xf32>
    %50 = arith.truncf %49 : vector<8x8xf32> to vector<8x8xbf16>
    "tpu.trace_start"() <{level = 10 : i32, message = "qk,kd->qd"}> : () -> ()
    %cst_19 = arith.constant dense<0.000000e+00> : vector<8x16xf32>
    %51 = tpu.matmul %50, %34, %cst_19 {dimension_numbers = #tpu.dot_dimension_numbers<[1], [0], [0], [1], [0, 0, 1, 1], [], []>} : vector<8x8xbf16>, vector<8x16xbf16>, vector<8x16xf32> -> vector<8x16xf32>
    "tpu.trace_stop"() : () -> ()
    %52 = arith.truncf %51 : vector<8x16xf32> to vector<8x16xbf16>
    %c0_20 = arith.constant 0 : index
    %c16 = arith.constant 16 : index
    %53 = vector.load %arg10[%c0_20, %c16] : memref<8x32xbf16, #tpu.memory_space<vmem>>, vector<8x16xbf16>
    tpu.vector_store %arg10[%c0_20, %c16], %52 {strides = array<i32>} : memref<8x32xbf16, #tpu.memory_space<vmem>>, vector<8x16xbf16>,
    %c0_21 = arith.constant 0 : index
    %c0_22 = arith.constant 0 : index
    %54 = vector.load %arg10[%c0_21, %c0_22] : memref<8x32xbf16, #tpu.memory_space<vmem>>, vector<8x32xbf16>
    %c0_23 = arith.constant 0 : index
    %c0_24 = arith.constant 0 : index
    %55 = vector.load %arg5[%c0_23, %c0_24] : memref<32x32xbf16, #tpu.memory_space<vmem>>, vector<32x32xbf16>
    %cst_25 = arith.constant dense<0.000000e+00> : vector<8x32xf32>
    %56 = tpu.matmul %54, %55, %cst_25 {dimension_numbers = #tpu.dot_dimension_numbers<[1], [0], [0], [1], [0, 0, 1, 1], [], []>} : vector<8x32xbf16>, vector<32x32xbf16>, vector<8x32xf32> -> vector<8x32xf32>
    %c0_26 = arith.constant 0 : index
    %c0_27 = arith.constant 0 : index
    %57 = vector.load %arg6[%c0_26, %c0_27] : memref<1x32xf32, #tpu.memory_space<vmem>>, vector<1x32xf32>
    %58 = vector.broadcast %57 : vector<1x32xf32> to vector<8x32xf32>
    %59 = arith.addf %56, %58 : vector<8x32xf32>
    %60 = arith.addf %59, %1 : vector<8x32xf32>
    %c0_28 = arith.constant 0 : index
    %c0_29 = arith.constant 0 : index
    %61 = vector.load %arg7[%c0_28, %c0_29] : memref<1x32xf32, #tpu.memory_space<vmem>>, vector<1x32xf32>
    %c0_30 = arith.constant 0 : index
    %c0_31 = arith.constant 0 : index
    %62 = vector.load %arg8[%c0_30, %c0_31] : memref<1x32xf32, #tpu.memory_space<vmem>>, vector<1x32xf32>
    %cst_32 = arith.constant dense<0.000000e+00> : vector<8xf32>
    %63 = vector.multi_reduction <add>, %60, %cst_32 [1] : vector<8x32xf32> to vector<8xf32>
    %64 = vector.shape_cast %63 : vector<8xf32> to vector<8x1xf32>
    %cst_33 = arith.constant 3.200000e+01 : f32
    %65 = vector.broadcast %cst_33 : f32 to vector<8x1xf32>
    %66 = arith.divf %64, %65 : vector<8x1xf32>
    %67 = vector.broadcast %66 : vector<8x1xf32> to vector<8x32xf32>
    %68 = arith.subf %60, %67 : vector<8x32xf32>
    %69 = arith.mulf %68, %68 : vector<8x32xf32>
    %cst_34 = arith.constant dense<0.000000e+00> : vector<8xf32>
    %70 = vector.multi_reduction <add>, %69, %cst_34 [1] : vector<8x32xf32> to vector<8xf32>
    %71 = vector.shape_cast %70 : vector<8xf32> to vector<8x1xf32>
    %cst_35 = arith.constant 3.200000e+01 : f32
    %72 = vector.broadcast %cst_35 : f32 to vector<8x1xf32>
    %73 = arith.divf %71, %72 : vector<8x1xf32>
    %cst_36 = arith.constant 9.99999996E-13 : f32
    %74 = vector.broadcast %cst_36 : f32 to vector<8x1xf32>
    %75 = arith.addf %73, %74 : vector<8x1xf32>
    %76 = math.rsqrt %75 : vector<8x1xf32>
    %77 = vector.broadcast %76 : vector<8x1xf32> to vector<8x32xf32>
    %78 = arith.mulf %68, %77 : vector<8x32xf32>
    %79 = vector.broadcast %61 : vector<1x32xf32> to vector<8x32xf32>
    %80 = arith.mulf %78, %79 : vector<8x32xf32>
    %81 = vector.broadcast %62 : vector<1x32xf32> to vector<8x32xf32>
    %82 = arith.addf %80, %81 : vector<8x32xf32>
    %83 = arith.truncf %82 : vector<8x32xf32> to vector<8x32xbf16>
    %c0_37 = arith.constant 0 : index
    %c0_38 = arith.constant 0 : index
    %84 = vector.load %arg9[%c0_37, %c0_38] : memref<8x32xbf16, #tpu.memory_space<vmem>>, vector<8x32xbf16>
    tpu.vector_store %arg9[%c0_37, %c0_38], %83 {strides = array<i32>} : memref<8x32xbf16, #tpu.memory_space<vmem>>, vector<8x32xbf16>,
    return
  }
  func.func @transform_0(%arg0: i32) -> (i32, i32) {
    %c0_i32 = arith.constant 0 : i32
    %c0_i32_0 = arith.constant 0 : i32
    return %arg0, %c0_i32 : i32, i32
  }
  func.func @transform_1(%arg0: i32) -> (i32, i32, i32) {
    %c0_i32 = arith.constant 0 : i32
    %c0_i32_0 = arith.constant 0 : i32
    %c0_i32_1 = arith.constant 0 : i32
    return %arg0, %c0_i32, %c0_i32_0 : i32, i32, i32
  }
  func.func @transform_2(%arg0: i32) -> (i32, i32) {
    %c0_i32 = arith.constant 0 : i32
    %c0_i32_0 = arith.constant 0 : i32
    %c0_i32_1 = arith.constant 0 : i32
    return %c0_i32, %c0_i32_0 : i32, i32
  }
  func.func @transform_3(%arg0: i32) -> (i32, i32) {
    %c0_i32 = arith.constant 0 : i32
    %c0_i32_0 = arith.constant 0 : i32
    %c0_i32_1 = arith.constant 0 : i32
    return %c0_i32, %c0_i32_0 : i32, i32
  }
  func.func @transform_4(%arg0: i32) -> (i32, i32) {
    %c0_i32 = arith.constant 0 : i32
    %c0_i32_0 = arith.constant 0 : i32
    %c0_i32_1 = arith.constant 0 : i32
    return %c0_i32, %c0_i32_0 : i32, i32
  }
  func.func @transform_5(%arg0: i32) -> (i32, i32) {
    %c0_i32 = arith.constant 0 : i32
    %c0_i32_0 = arith.constant 0 : i32
    %c0_i32_1 = arith.constant 0 : i32
    return %c0_i32, %c0_i32_0 : i32, i32
  }
  func.func @transform_6(%arg0: i32) -> (i32, i32) {
    %c0_i32 = arith.constant 0 : i32
    %c0_i32_0 = arith.constant 0 : i32
    %c0_i32_1 = arith.constant 0 : i32
    return %c0_i32, %c0_i32_0 : i32, i32
  }
  func.func @transform_7(%arg0: i32) -> (i32, i32) {
    %c0_i32 = arith.constant 0 : i32
    %c0_i32_0 = arith.constant 0 : i32
    %c0_i32_1 = arith.constant 0 : i32
    return %c0_i32, %c0_i32_0 : i32, i32
  }
  func.func @transform_8(%arg0: i32) -> (i32, i32) {
    %c0_i32 = arith.constant 0 : i32
    %c0_i32_0 = arith.constant 0 : i32
    return %arg0, %c0_i32 : i32, i32
  }
}

module attributes {stable_mosaic.version = 11 : i64} {
  func.func @_ffn_block_kernel(%arg0: i32, %arg1: i32, %arg2: memref<16x32xbf16, #tpu.memory_space<vmem>>, %arg3: memref<32x64xbf16, #tpu.memory_space<vmem>>, %arg4: memref<1x64xf32, #tpu.memory_space<vmem>>, %arg5: memref<64x32xbf16, #tpu.memory_space<vmem>>, %arg6: memref<1x32xf32, #tpu.memory_space<vmem>>, %arg7: memref<1x32xf32, #tpu.memory_space<vmem>>, %arg8: memref<1x32xf32, #tpu.memory_space<vmem>>, %arg9: memref<16x32xbf16, #tpu.memory_space<vmem>>, %arg10: memref<16x32xf32, #tpu.memory_space<vmem>>) attributes {dimension_semantics = [#tpu.dimension_semantics<parallel>, #tpu.dimension_semantics<arbitrary>], iteration_bounds = array<i64: 1, 1>, scalar_prefetch = 0 : i64, scratch_operands = 1 : i64, tpu.core_type = #tpu.core_type<tc>, window_params = [{transform_indices = @transform_0, window_bounds = array<i64: 16, 32>}, {transform_indices = @transform_1, window_bounds = array<i64: 32, 64>}, {transform_indices = @transform_2, window_bounds = array<i64: 1, 64>}, {transform_indices = @transform_3, window_bounds = array<i64: 64, 32>}, {pipeline_mode = #tpu.pipeline_mode<synchronous>, transform_indices = @transform_4, window_bounds = array<i64: 1, 32>}, {pipeline_mode = #tpu.pipeline_mode<synchronous>, transform_indices = @transform_5, window_bounds = array<i64: 1, 32>}, {pipeline_mode = #tpu.pipeline_mode<synchronous>, transform_indices = @transform_6, window_bounds = array<i64: 1, 32>}, {transform_indices = @transform_7, window_bounds = array<i64: 16, 32>}]} {
    %c0_i32 = arith.constant 0 : i32
    %0 = arith.cmpi eq, %arg1, %c0_i32 : i32
    %1 = arith.extui %0 : i1 to i32
    %c0_i32_0 = arith.constant 0 : i32
    %2 = arith.cmpi ne, %1, %c0_i32_0 : i32
    scf.if %2 {
      %cst_19 = arith.constant 0.000000e+00 : f32
      %31 = vector.broadcast %cst_19 : f32 to vector<16x32xf32>
      %c0_20 = arith.constant 0 : index
      %c0_21 = arith.constant 0 : index
      %32 = vector.load %arg10[%c0_20, %c0_21] : memref<16x32xf32, #tpu.memory_space<vmem>>, vector<16x32xf32>
      tpu.vector_store %arg10[%c0_20, %c0_21], %31 {strides = array<i32>} : memref<16x32xf32, #tpu.memory_space<vmem>>, vector<16x32xf32>,
    } else {
    }
    %c0 = arith.constant 0 : index
    %c0_1 = arith.constant 0 : index
    %3 = vector.load %arg2[%c0, %c0_1] : memref<16x32xbf16, #tpu.memory_space<vmem>>, vector<16x32xbf16>
    %c0_2 = arith.constant 0 : index
    %c0_3 = arith.constant 0 : index
    %4 = vector.load %arg3[%c0_2, %c0_3] : memref<32x64xbf16, #tpu.memory_space<vmem>>, vector<32x64xbf16>
    %cst = arith.constant dense<0.000000e+00> : vector<16x64xf32>
    %5 = tpu.matmul %3, %4, %cst {dimension_numbers = #tpu.dot_dimension_numbers<[1], [0], [0], [1], [0, 0, 1, 1], [], []>} : vector<16x32xbf16>, vector<32x64xbf16>, vector<16x64xf32> -> vector<16x64xf32>
    %c0_4 = arith.constant 0 : index
    %c0_5 = arith.constant 0 : index
    %6 = vector.load %arg4[%c0_4, %c0_5] : memref<1x64xf32, #tpu.memory_space<vmem>>, vector<1x64xf32>
    %7 = vector.broadcast %6 : vector<1x64xf32> to vector<16x64xf32>
    %8 = arith.addf %5, %7 : vector<16x64xf32>
    %cst_6 = arith.constant 5.000000e-01 : f32
    %9 = vector.broadcast %cst_6 : f32 to vector<16x64xf32>
    %10 = arith.mulf %9, %8 : vector<16x64xf32>
    %cst_7 = arith.constant 4.471500e-02 : f32
    %11 = vector.broadcast %cst_7 : f32 to vector<16x64xf32>
    %12 = arith.mulf %11, %8 : vector<16x64xf32>
    %13 = arith.mulf %12, %8 : vector<16x64xf32>
    %14 = arith.mulf %13, %8 : vector<16x64xf32>
    %15 = arith.addf %8, %14 : vector<16x64xf32>
    %cst_8 = arith.constant 0.797884583 : f32
    %16 = vector.broadcast %cst_8 : f32 to vector<16x64xf32>
    %17 = arith.mulf %16, %15 : vector<16x64xf32>
    %18 = math.tanh %17 : vector<16x64xf32>
    %cst_9 = arith.constant 1.000000e+00 : f32
    %19 = vector.broadcast %cst_9 : f32 to vector<16x64xf32>
    %20 = arith.addf %19, %18 : vector<16x64xf32>
    %21 = arith.mulf %10, %20 : vector<16x64xf32>
    %c0_10 = arith.constant 0 : index
    %c0_11 = arith.constant 0 : index
    %22 = vector.load %arg10[%c0_10, %c0_11] : memref<16x32xf32, #tpu.memory_space<vmem>>, vector<16x32xf32>
    %23 = arith.truncf %21 : vector<16x64xf32> to vector<16x64xbf16>
    %c0_12 = arith.constant 0 : index
    %c0_13 = arith.constant 0 : index
    %24 = vector.load %arg5[%c0_12, %c0_13] : memref<64x32xbf16, #tpu.memory_space<vmem>>, vector<64x32xbf16>
    %cst_14 = arith.constant dense<0.000000e+00> : vector<16x32xf32>
    %25 = tpu.matmul %23, %24, %cst_14 {dimension_numbers = #tpu.dot_dimension_numbers<[1], [0], [0], [1], [0, 0, 1, 1], [], []>} : vector<16x64xbf16>, vector<64x32xbf16>, vector<16x32xf32> -> vector<16x32xf32>
    %26 = arith.addf %22, %25 : vector<16x32xf32>
    %c0_15 = arith.constant 0 : index
    %c0_16 = arith.constant 0 : index
    %27 = vector.load %arg10[%c0_15, %c0_16] : memref<16x32xf32, #tpu.memory_space<vmem>>, vector<16x32xf32>
    tpu.vector_store %arg10[%c0_15, %c0_16], %26 {strides = array<i32>} : memref<16x32xf32, #tpu.memory_space<vmem>>, vector<16x32xf32>,
    %c0_i32_17 = arith.constant 0 : i32
    %28 = arith.cmpi eq, %arg1, %c0_i32_17 : i32
    %29 = arith.extui %28 : i1 to i32
    %c0_i32_18 = arith.constant 0 : i32
    %30 = arith.cmpi ne, %29, %c0_i32_18 : i32
    scf.if %30 {
      %c0_19 = arith.constant 0 : index
      %c0_20 = arith.constant 0 : index
      %31 = vector.load %arg10[%c0_19, %c0_20] : memref<16x32xf32, #tpu.memory_space<vmem>>, vector<16x32xf32>
      %c0_21 = arith.constant 0 : index
      %c0_22 = arith.constant 0 : index
      %32 = vector.load %arg6[%c0_21, %c0_22] : memref<1x32xf32, #tpu.memory_space<vmem>>, vector<1x32xf32>
      %33 = vector.broadcast %32 : vector<1x32xf32> to vector<16x32xf32>
      %34 = arith.addf %31, %33 : vector<16x32xf32>
      %c0_23 = arith.constant 0 : index
      %c0_24 = arith.constant 0 : index
      %35 = vector.load %arg2[%c0_23, %c0_24] : memref<16x32xbf16, #tpu.memory_space<vmem>>, vector<16x32xbf16>
      %36 = arith.extf %35 : vector<16x32xbf16> to vector<16x32xf32>
      %37 = arith.addf %34, %36 : vector<16x32xf32>
      %c0_25 = arith.constant 0 : index
      %c0_26 = arith.constant 0 : index
      %38 = vector.load %arg7[%c0_25, %c0_26] : memref<1x32xf32, #tpu.memory_space<vmem>>, vector<1x32xf32>
      %c0_27 = arith.constant 0 : index
      %c0_28 = arith.constant 0 : index
      %39 = vector.load %arg8[%c0_27, %c0_28] : memref<1x32xf32, #tpu.memory_space<vmem>>, vector<1x32xf32>
      %cst_29 = arith.constant dense<0.000000e+00> : vector<16xf32>
      %40 = vector.multi_reduction <add>, %37, %cst_29 [1] : vector<16x32xf32> to vector<16xf32>
      %41 = vector.shape_cast %40 : vector<16xf32> to vector<16x1xf32>
      %cst_30 = arith.constant 3.200000e+01 : f32
      %42 = vector.broadcast %cst_30 : f32 to vector<16x1xf32>
      %43 = arith.divf %41, %42 : vector<16x1xf32>
      %44 = vector.broadcast %43 : vector<16x1xf32> to vector<16x32xf32>
      %45 = arith.subf %37, %44 : vector<16x32xf32>
      %46 = arith.mulf %45, %45 : vector<16x32xf32>
      %cst_31 = arith.constant dense<0.000000e+00> : vector<16xf32>
      %47 = vector.multi_reduction <add>, %46, %cst_31 [1] : vector<16x32xf32> to vector<16xf32>
      %48 = vector.shape_cast %47 : vector<16xf32> to vector<16x1xf32>
      %cst_32 = arith.constant 3.200000e+01 : f32
      %49 = vector.broadcast %cst_32 : f32 to vector<16x1xf32>
      %50 = arith.divf %48, %49 : vector<16x1xf32>
      %cst_33 = arith.constant 9.99999996E-13 : f32
      %51 = vector.broadcast %cst_33 : f32 to vector<16x1xf32>
      %52 = arith.addf %50, %51 : vector<16x1xf32>
      %53 = math.rsqrt %52 : vector<16x1xf32>
      %54 = vector.broadcast %53 : vector<16x1xf32> to vector<16x32xf32>
      %55 = arith.mulf %45, %54 : vector<16x32xf32>
      %56 = vector.broadcast %38 : vector<1x32xf32> to vector<16x32xf32>
      %57 = arith.mulf %55, %56 : vector<16x32xf32>
      %58 = vector.broadcast %39 : vector<1x32xf32> to vector<16x32xf32>
      %59 = arith.addf %57, %58 : vector<16x32xf32>
      %60 = arith.truncf %59 : vector<16x32xf32> to vector<16x32xbf16>
      %c0_34 = arith.constant 0 : index
      %c0_35 = arith.constant 0 : index
      %61 = vector.load %arg9[%c0_34, %c0_35] : memref<16x32xbf16, #tpu.memory_space<vmem>>, vector<16x32xbf16>
      tpu.vector_store %arg9[%c0_34, %c0_35], %60 {strides = array<i32>} : memref<16x32xbf16, #tpu.memory_space<vmem>>, vector<16x32xbf16>,
    } else {
    }
    return
  }
  func.func @transform_0(%arg0: i32, %arg1: i32) -> (i32, i32) {
    %c0_i32 = arith.constant 0 : i32
    %c0_i32_0 = arith.constant 0 : i32
    return %arg0, %c0_i32 : i32, i32
  }
  func.func @transform_1(%arg0: i32, %arg1: i32) -> (i32, i32) {
    %c0_i32 = arith.constant 0 : i32
    %c0_i32_0 = arith.constant 0 : i32
    return %c0_i32, %arg1 : i32, i32
  }
  func.func @transform_2(%arg0: i32, %arg1: i32) -> (i32, i32) {
    %c0_i32 = arith.constant 0 : i32
    %c0_i32_0 = arith.constant 0 : i32
    return %c0_i32, %arg1 : i32, i32
  }
  func.func @transform_3(%arg0: i32, %arg1: i32) -> (i32, i32) {
    %c0_i32 = arith.constant 0 : i32
    %c0_i32_0 = arith.constant 0 : i32
    return %arg1, %c0_i32 : i32, i32
  }
  func.func @transform_4(%arg0: i32, %arg1: i32) -> (i32, i32) {
    %c0_i32 = arith.constant 0 : i32
    %c0_i32_0 = arith.constant 0 : i32
    %c0_i32_1 = arith.constant 0 : i32
    return %c0_i32, %c0_i32_0 : i32, i32
  }
  func.func @transform_5(%arg0: i32, %arg1: i32) -> (i32, i32) {
    %c0_i32 = arith.constant 0 : i32
    %c0_i32_0 = arith.constant 0 : i32
    %c0_i32_1 = arith.constant 0 : i32
    return %c0_i32, %c0_i32_0 : i32, i32
  }
  func.func @transform_6(%arg0: i32, %arg1: i32) -> (i32, i32) {
    %c0_i32 = arith.constant 0 : i32
    %c0_i32_0 = arith.constant 0 : i32
    %c0_i32_1 = arith.constant 0 : i32
    return %c0_i32, %c0_i32_0 : i32, i32
  }
  func.func @transform_7(%arg0: i32, %arg1: i32) -> (i32, i32) {
    %c0_i32 = arith.constant 0 : i32
    %c0_i32_0 = arith.constant 0 : i32
    return %arg0, %c0_i32 : i32, i32
  }
}

module attributes {stable_mosaic.version = 11 : i64} {
  func.func @_pooler_kernel(%arg0: i32, %arg1: memref<2x32xbf16, #tpu.memory_space<vmem>>, %arg2: memref<32x32xbf16, #tpu.memory_space<vmem>>, %arg3: memref<1x32xf32, #tpu.memory_space<vmem>>, %arg4: memref<2x32xf32, #tpu.memory_space<vmem>>) attributes {dimension_semantics = [#tpu.dimension_semantics<parallel>], iteration_bounds = array<i64: 1>, scalar_prefetch = 0 : i64, scratch_operands = 0 : i64, tpu.core_type = #tpu.core_type<tc>, window_params = [{pipeline_mode = #tpu.pipeline_mode<synchronous>, transform_indices = @transform_0, window_bounds = array<i64: 2, 32>}, {pipeline_mode = #tpu.pipeline_mode<synchronous>, transform_indices = @transform_1, window_bounds = array<i64: 32, 32>}, {pipeline_mode = #tpu.pipeline_mode<synchronous>, transform_indices = @transform_2, window_bounds = array<i64: 1, 32>}, {pipeline_mode = #tpu.pipeline_mode<synchronous>, transform_indices = @transform_3, window_bounds = array<i64: 2, 32>}]} {
    %c0 = arith.constant 0 : index
    %c0_0 = arith.constant 0 : index
    %0 = vector.load %arg1[%c0, %c0_0] : memref<2x32xbf16, #tpu.memory_space<vmem>>, vector<2x32xbf16>
    %c0_1 = arith.constant 0 : index
    %c0_2 = arith.constant 0 : index
    %1 = vector.load %arg2[%c0_1, %c0_2] : memref<32x32xbf16, #tpu.memory_space<vmem>>, vector<32x32xbf16>
    %cst = arith.constant dense<0.000000e+00> : vector<2x32xf32>
    %2 = tpu.matmul %0, %1, %cst {dimension_numbers = #tpu.dot_dimension_numbers<[1], [0], [0], [1], [0, 0, 1, 1], [], []>} : vector<2x32xbf16>, vector<32x32xbf16>, vector<2x32xf32> -> vector<2x32xf32>
    %c0_3 = arith.constant 0 : index
    %c0_4 = arith.constant 0 : index
    %3 = vector.load %arg3[%c0_3, %c0_4] : memref<1x32xf32, #tpu.memory_space<vmem>>, vector<1x32xf32>
    %4 = vector.broadcast %3 : vector<1x32xf32> to vector<2x32xf32>
    %5 = arith.addf %2, %4 : vector<2x32xf32>
    %6 = math.tanh %5 : vector<2x32xf32>
    %c0_5 = arith.constant 0 : index
    %c0_6 = arith.constant 0 : index
    %7 = vector.load %arg4[%c0_5, %c0_6] : memref<2x32xf32, #tpu.memory_space<vmem>>, vector<2x32xf32>
    tpu.vector_store %arg4[%c0_5, %c0_6], %6 {strides = array<i32>} : memref<2x32xf32, #tpu.memory_space<vmem>>, vector<2x32xf32>,
    return
  }
  func.func @transform_0(%arg0: i32) -> (i32, i32) {
    %c0_i32 = arith.constant 0 : i32
    %c0_i32_0 = arith.constant 0 : i32
    %c0_i32_1 = arith.constant 0 : i32
    return %c0_i32, %c0_i32_0 : i32, i32
  }
  func.func @transform_1(%arg0: i32) -> (i32, i32) {
    %c0_i32 = arith.constant 0 : i32
    %c0_i32_0 = arith.constant 0 : i32
    %c0_i32_1 = arith.constant 0 : i32
    return %c0_i32, %c0_i32_0 : i32, i32
  }
  func.func @transform_2(%arg0: i32) -> (i32, i32) {
    %c0_i32 = arith.constant 0 : i32
    %c0_i32_0 = arith.constant 0 : i32
    %c0_i32_1 = arith.constant 0 : i32
    return %c0_i32, %c0_i32_0 : i32, i32
  }
  func.func @transform_3(%arg0: i32) -> (i32, i32) {
    %c0_i32 = arith.constant 0 : i32
    %c0_i32_0 = arith.constant 0 : i32
    %c0_i32_1 = arith.constant 0 : i32
    return %c0_i32, %c0_i32_0 : i32, i32
  }
}

</mosaic_0001>

<llo_original>
// kernel: bert_encoder_forward.11
$region0: #{bert_encoder_forward.11}
  #allocation0 [shape = 'u32[]', space=smem, size = 0x4, offset = 0x4, fixed_abs, tag = 'smem constant byte address 0x4 - core index']
  #allocation1 [shape = 'u32[144,128]{1,0:T(1,128)}', space=vmem, size = 0x12000, scoped, tag = 'internal scratch']
  %s0 = inlined_call_operand.vmem [shape: bf16[2,32], index: 0, kind: input, shape index: {}]
  %s1 = inlined_call_operand.vmem [shape: bf16[32,32], index: 1, kind: input, shape index: {}]
  %s2 = inlined_call_operand.vmem [shape: f32[1,32], index: 2, kind: input, shape index: {}]
  %s3 = inlined_call_operand.hbm [shape: f32[2,32], index: 3, kind: output, shape index: {}]
  %s4 = sld [smem:[#allocation0]]
  $region22: #{bert_encoder_forward.11} parent=0
    _
  %s6 = ssub.s32 1, %s4
  %s7 = scalar_select 0, %s6, %s4
  $region1: #{bert_encoder_forward.11} parent=0
    #allocation2 [shape = 'u8[1024]{0}', space=vmem, size = 0x400, scoped, tag = 'output window, operand 0, single buffered']
    #allocation3 [shape = 's32[1]{0}', space=sflag, size = 0x4, scoped, tag = 'scoped memory for bert_encoder_forward.11']
    %8 = vsyncpa [#allocation3], 0
    // Predicated region
    $region2: #{bert_encoder_forward.11} parent=1 // pred_check
      _
    $region3: #{bert_encoder_forward.11} parent=1 // pred_check_branch
      %10 = sbr.rel (0) target = $region5
    $region4: #{bert_encoder_forward.11} parent=1 // pred_region
      _
    $region5: #{bert_encoder_forward.11} parent=1 // pred_fallthru
      _
    // Predicated region
    $region6: #{bert_encoder_forward.11} parent=1 // pred_check
      _
    $region7: #{bert_encoder_forward.11} parent=1 // pred_check_branch
      %12 = sbr.rel (0) target = $region9
    $region8: #{bert_encoder_forward.11} parent=1 // pred_region
      _
    $region9: #{bert_encoder_forward.11} parent=1 // pred_fallthru
      _
    // Predicated region
    $region10: #{bert_encoder_forward.11} parent=1 // pred_check
      _
    $region11: #{bert_encoder_forward.11} parent=1 // pred_check_branch
      %14 = sbr.rel (0) target = $region13
    $region12: #{bert_encoder_forward.11} parent=1 // pred_region
      _
    $region13: #{bert_encoder_forward.11} parent=1 // pred_fallthru
      _
    %v16 = vld [vmem:[%s0] sm:$0x1]
    %v17 = vld [vmem:[%s1] sm:$0xf]
    %v18 = vld [vmem:[%s1 + $0x4] sm:$0xf]
    %v19 = vld [vmem:[%s1 + $0x8] sm:$0xf]
    %v20 = vld [vmem:[%s1 + $0xc] sm:$0xf]
    %v21 = vld [vmem:[%s2] sm:$0x1]
    %v23 = vlaneseq
    %v24 = vshrl.u32 %v23, 7
    %v25 = vsub.s32 0, %v24
    %v26 = vrot.slane %v21, %v25
    %v32 = vunpack.c.l.b16 %v17
    %v33 = vunpack.c.l.b16 %v18
    %v34 = vunpack.c.l.b16 %v19
    %v35 = vunpack.c.l.b16 %v20
    %v36 = vpack.c.b16 %v33, %v32
    %v37 = vpack.c.b16 %v35, %v34
    %vm40 = vcmask 261120
    %v42 = vsel %vm40, %v16, 0
    %44 = vmatprep.subr.bf16.mxu0 0
    %45 = vmatpush1.bf16.msra.mxu0 %v36
    %46 = vmatprep.subr.bf16.mxu0 0
    %47 = vmatpush1.bf16.msra.mxu0 %v37
    %48 = vmatprep.subr.bf16.mxu0 0
    %49 = vmatpush1.bf16.msra.mxu0 0
    %50 = vmatprep.subr.bf16.mxu0 0
    %51 = vmatpush1.bf16.msra.mxu0 0
    %52 = vmatprep.subr.bf16.mxu0 0
    %53 = vmatpush1.bf16.msra.mxu0 0
    %54 = vmatprep.subr.bf16.mxu0 0
    %55 = vmatpush1.bf16.msra.mxu0 0
    %56 = vmatprep.subr.bf16.mxu0 0
    %57 = vmatpush1.bf16.msra.mxu0 0
    %58 = vmatprep.subr.bf16.mxu0 0
    %59 = vmatpush1.bf16.msra.mxu0 0
    %60 = vmatprep.subr.bf16.mxu0 0
    %61 = vmatpush1.bf16.msra.mxu0 0
    %62 = vmatprep.subr.bf16.mxu0 0
    %63 = vmatpush1.bf16.msra.mxu0 0
    %64 = vmatprep.subr.bf16.mxu0 0
    %65 = vmatpush1.bf16.msra.mxu0 0
    %66 = vmatprep.subr.bf16.mxu0 0
    %67 = vmatpush1.bf16.msra.mxu0 0
    %68 = vmatprep.subr.bf16.mxu0 0
    %69 = vmatpush1.bf16.msra.mxu0 0
    %70 = vmatprep.subr.bf16.mxu0 0
    %71 = vmatpush1.bf16.msra.mxu0 0
    %72 = vmatprep.subr.bf16.mxu0 0
    %73 = vmatpush1.bf16.msra.mxu0 0
    %74 = vmatprep.subr.bf16.mxu0 0
    %75 = vmatpush1.bf16.msra.mxu0 0
    %76 = vmatprep.mubr.bf16.mxu0 0
    %77 = vmatmul.mubr.bf16.gmra.mrb[0].mxu0 %v42
    %v78 = vpop.f32.mrb[0].mxu0
    %v79 = vadd.f32 %v26, %v78
    %v80 = vpop.f32.mrb[0].mxu0
    %v81 = vpop.f32.mrb[0].mxu0
    %v82 = vpop.f32.mrb[0].mxu0
    %83 = vdwg.mxu0
    %v84 = vtanh.pop %v79
    %vm85 = vcmask 254976
    %86 = vst.msk [vmem:[#allocation2] sm:$0x3] %vm85, %v84
    // Predicated region
    $region14: #{bert_encoder_forward.11} parent=1 // pred_check
      _
    $region15: #{bert_encoder_forward.11} parent=1 // pred_check_branch
      %88 = sbr.rel (0) target = $region17
    $region16: #{bert_encoder_forward.11} parent=1 // pred_region
      %s90 = ssub.s32 32, 32
      %91 = vsyncadd [#allocation3], %s90
      %s93 = sshll.u32 [#allocation2], 4
      %s94 = int_to_ptr.vmem [resolvable:$true] %s93
      %96 = dma.vmem_to_hbm [thread:$0]  %s94, 32, %s3, [#allocation3]
    $region17: #{bert_encoder_forward.11} parent=1 // pred_fallthru
      _
    // Predicated region
    $region18: #{bert_encoder_forward.11} parent=1 // pred_check
      _
    $region19: #{bert_encoder_forward.11} parent=1 // pred_check_branch
      %98 = sbr.rel (0) target = $region21
    $region20: #{bert_encoder_forward.11} parent=1 // pred_region
      %99 = dma.done [#allocation3], 32
    $region21: #{bert_encoder_forward.11} parent=1 // pred_fallthru
      _
    %100 = vsyncpa [#allocation3], 1

// kernel: bert_encoder_forward.6
$region0: #{bert_encoder_forward.6}
  #allocation0 [shape = 'u32[]', space=smem, size = 0x4, offset = 0x4, fixed_abs, tag = 'smem constant byte address 0x4 - core index']
  #allocation1 [shape = 'u32[144,128]{1,0:T(1,128)}', space=vmem, size = 0x12000, scoped, tag = 'internal scratch']
  %s0 = inlined_call_operand.vmem [shape: f32[16,32], index: 0, kind: input, shape index: {}]
  %s1 = inlined_call_operand.vmem [shape: f32[1,32], index: 1, kind: input, shape index: {}]
  %s2 = inlined_call_operand.vmem [shape: f32[1,32], index: 2, kind: input, shape index: {}]
  %s3 = inlined_call_operand.vmem [shape: bf16[16,32], index: 3, kind: output, shape index: {}]
  %s4 = sld [smem:[#allocation0]]
  $region22: #{bert_encoder_forward.6} parent=0
    _
  %s6 = ssub.s32 1, %s4
  %s7 = scalar_select 0, %s6, %s4
  // Predicated region
  $region2: #{bert_encoder_forward.6} parent=0 // pred_check
    _
  $region3: #{bert_encoder_forward.6} parent=0 // pred_check_branch
    %9 = sbr.rel (0) target = $region5
  $region4: #{bert_encoder_forward.6} parent=0 // pred_region
    _
  $region5: #{bert_encoder_forward.6} parent=0 // pred_fallthru
    _
  // Predicated region
  $region6: #{bert_encoder_forward.6} parent=0 // pred_check
    _
  $region7: #{bert_encoder_forward.6} parent=0 // pred_check_branch
    %11 = sbr.rel (0) target = $region9
  $region8: #{bert_encoder_forward.6} parent=0 // pred_region
    _
  $region9: #{bert_encoder_forward.6} parent=0 // pred_fallthru
    _
  // Predicated region
  $region10: #{bert_encoder_forward.6} parent=0 // pred_check
    _
  $region11: #{bert_encoder_forward.6} parent=0 // pred_check_branch
    %13 = sbr.rel (0) target = $region13
  $region12: #{bert_encoder_forward.6} parent=0 // pred_region
    _
  $region13: #{bert_encoder_forward.6} parent=0 // pred_fallthru
    _
  %v14 = vld [vmem:[%s0] sm:$0xff]
  %v15 = vld [vmem:[%s0 + $0x8] sm:$0xff]
  %v16 = vld [vmem:[%s1] sm:$0x1]
  %v17 = vld [vmem:[%s2] sm:$0x1]
  %vm18 = vcmask 261120
  %v19 = vsel %vm18, %v14, 0.0
  %20 = vadd.xlane.f32.xlu0 %v19
  %v21 = vpop.xlane.xlu0 %20
  %v22 = vsel %vm18, %v15, 0.0
  %23 = vadd.xlane.f32.xlu0 %v22
  %v24 = vpop.xlane.xlu0 %23
  %v25 = vrcp.pop 32.0
  %v26 = vmul.f32 %v21, %v25
  %v27 = vmul.f32 %v24, %v25
  %v28 = vsub.f32 %v14, %v26
  %v29 = vsub.f32 %v15, %v27
  %v30 = vmul.f32 %v28, %v28
  %v31 = vmul.f32 %v29, %v29
  %v32 = vsel %vm18, %v30, 0.0
  %33 = vadd.xlane.f32.xlu0 %v32
  %v34 = vpop.xlane.xlu0 %33
  %v35 = vsel %vm18, %v31, 0.0
  %36 = vadd.xlane.f32.xlu0 %v35
  %v37 = vpop.xlane.xlu0 %36
  %v38 = vmul.f32 %v34, %v25
  %v39 = vmul.f32 %v37, %v25
  %v40 = vadd.f32 %v38, 1e-12
  %v41 = vadd.f32 %v39, 1e-12
  %v42 = vrsqrt.pop %v40
  %v43 = vrsqrt.pop %v41
  %v44 = vmul.f32 %v28, %v42
  %v45 = vmul.f32 %v29, %v43
  %v47 = vlaneseq
  %v48 = vshrl.u32 %v47, 7
  %v49 = vsub.s32 0, %v48
  %v50 = vrot.slane %v16, %v49
  %v52 = vmul.f32 %v44, %v50
  %v53 = vmul.f32 %v45, %v50
  %v55 = vlaneseq
  %v56 = vshrl.u32 %v55, 7
  %v57 = vsub.s32 0, %v56
  %v58 = vrot.slane %v17, %v57
  %v60 = vadd.f32 %v52, %v58
  %v61 = vadd.f32 %v53, %v58
  %v62 = vpack.c.bf16 %v61, %v60
  %v64 = vunpack.c.l.b16 %v62
  %v65 = vunpack.c.h.b16 %v62
  %v66 = vpack.c.b16 %v64, %v64
  %v67 = vpack.c.b16 %v65, %v65
  %vm70 = vcmask 257024
  %71 = vst.msk [vmem:[%s3] sm:$0xf] %vm70, %v66
  %72 = vst.msk [vmem:[%s3 + $0x4] sm:$0xf] %vm70, %v67
  // Predicated region
  $region14: #{bert_encoder_forward.6} parent=0 // pred_check
    _
  $region15: #{bert_encoder_forward.6} parent=0 // pred_check_branch
    %74 = sbr.rel (0) target = $region17
  $region16: #{bert_encoder_forward.6} parent=0 // pred_region
    _
  $region17: #{bert_encoder_forward.6} parent=0 // pred_fallthru
    _
  // Predicated region
  $region18: #{bert_encoder_forward.6} parent=0 // pred_check
    _
  $region19: #{bert_encoder_forward.6} parent=0 // pred_check_branch
    %76 = sbr.rel (0) target = $region21
  $region20: #{bert_encoder_forward.6} parent=0 // pred_region
    _
  $region21: #{bert_encoder_forward.6} parent=0 // pred_fallthru
    _

// kernel: bert_encoder_forward.8
$region0: #{bert_encoder_forward.8}
  #allocation0 [shape = 'u32[]', space=smem, size = 0x4, offset = 0x4, fixed_abs, tag = 'smem constant byte address 0x4 - core index']
  #allocation1 [shape = 'u32[144,128]{1,0:T(1,128)}', space=vmem, size = 0x12000, scoped, tag = 'internal scratch']
  #allocation2 [shape = 'f32[16,32]{1,0:T(8,128)}', space=vmem, size = 0x2000, scoped, tag = 'scratch operand']
  %s0 = inlined_call_operand.vmem [shape: bf16[16,32], index: 0, kind: input, shape index: {}]
  %s1 = inlined_call_operand.vmem [shape: bf16[32,64], index: 1, kind: input, shape index: {}]
  %s2 = inlined_call_operand.vmem [shape: f32[1,64], index: 2, kind: input, shape index: {}]
  %s3 = inlined_call_operand.vmem [shape: bf16[64,32], index: 3, kind: input, shape index: {}]
  %s4 = inlined_call_operand.vmem [shape: f32[1,32], index: 4, kind: input, shape index: {}]
  %s5 = inlined_call_operand.vmem [shape: f32[1,32], index: 5, kind: input, shape index: {}]
  %s6 = inlined_call_operand.vmem [shape: f32[1,32], index: 6, kind: input, shape index: {}]
  %s7 = inlined_call_operand.vmem [shape: bf16[16,32], index: 7, kind: output, shape index: {}]
  %s8 = sld [smem:[#allocation0]]
  $region46: #{bert_encoder_forward.8} parent=0
    _
  %s10 = ssub.s32 1, %s8
  %s11 = scalar_select 0, %s10, %s8
  // Predicated region
  $region2: #{bert_encoder_forward.8} parent=0 // pred_check
    _
  $region3: #{bert_encoder_forward.8} parent=0 // pred_check_branch
    %13 = sbr.rel (0) target = $region5
  $region4: #{bert_encoder_forward.8} parent=0 // pred_region
    _
  $region5: #{bert_encoder_forward.8} parent=0 // pred_fallthru
    _
  // Predicated region
  $region6: #{bert_encoder_forward.8} parent=0 // pred_check
    _
  $region7: #{bert_encoder_forward.8} parent=0 // pred_check_branch
    %15 = sbr.rel (0) target = $region9
  $region8: #{bert_encoder_forward.8} parent=0 // pred_region
    _
  $region9: #{bert_encoder_forward.8} parent=0 // pred_fallthru
    _
  // Predicated region
  $region10: #{bert_encoder_forward.8} parent=0 // pred_check
    _
  $region11: #{bert_encoder_forward.8} parent=0 // pred_check_branch
    %17 = sbr.rel (0) target = $region13
  $region12: #{bert_encoder_forward.8} parent=0 // pred_region
    _
  $region13: #{bert_encoder_forward.8} parent=0 // pred_fallthru
    _
  // Predicated region
  $region14: #{bert_encoder_forward.8} parent=0 // pred_check
    _
  $region15: #{bert_encoder_forward.8} parent=0 // pred_check_branch
    %19 = sbr.rel (0) target = $region17
  $region16: #{bert_encoder_forward.8} parent=0 // pred_region
    _
  $region17: #{bert_encoder_forward.8} parent=0 // pred_fallthru
    _
  // Predicated region
  $region18: #{bert_encoder_forward.8} parent=0 // pred_check
    _
  $region19: #{bert_encoder_forward.8} parent=0 // pred_check_branch
    %21 = sbr.rel (0) target = $region21
  $region20: #{bert_encoder_forward.8} parent=0 // pred_region
    _
  $region21: #{bert_encoder_forward.8} parent=0 // pred_fallthru
    _
  // Predicated region
  $region22: #{bert_encoder_forward.8} parent=0 // pred_check
    _
  $region23: #{bert_encoder_forward.8} parent=0 // pred_check_branch
    %23 = sbr.rel (0) target = $region25
  $region24: #{bert_encoder_forward.8} parent=0 // pred_region
    _
  $region25: #{bert_encoder_forward.8} parent=0 // pred_fallthru
    _
  // Predicated region
  $region26: #{bert_encoder_forward.8} parent=0 // pred_check
    _
  $region27: #{bert_encoder_forward.8} parent=0 // pred_check_branch
    %25 = sbr.rel (0) target = $region29
  $region28: #{bert_encoder_forward.8} parent=0 // pred_region
    _
  $region29: #{bert_encoder_forward.8} parent=0 // pred_fallthru
    _
  %p27 = scmp.eq.s32.totalorder 0, 0
  // Predicated region
  $region30: #{bert_encoder_forward.8} parent=0 // pred_check
    %p28 = pneg %p27
  $region31: #{bert_encoder_forward.8} parent=0 // pred_check_branch
    %30 = sbr.rel (%p28) target = $region33
  $region32: #{bert_encoder_forward.8} parent=0 // pred_region
    %vm31 = vcmask 261120
    %32 = vst.msk [vmem:[#allocation2] sm:$0xff] %vm31, 0.0
    %33 = vst.msk [vmem:[#allocation2 + $0x8] sm:$0xff] %vm31, 0.0
  $region33: #{bert_encoder_forward.8} parent=0 // pred_fallthru
    _
  %v34 = vld [vmem:[%s0] sm:$0xf]
  %v35 = vld [vmem:[%s0 + $0x4] sm:$0xf]
  %v36 = vld [vmem:[%s1] sm:$0xf]
  %v37 = vld [vmem:[%s1 + $0x4] sm:$0xf]
  %v38 = vld [vmem:[%s1 + $0x8] sm:$0xf]
  %v39 = vld [vmem:[%s1 + $0xc] sm:$0xf]
  %v40 = vld [vmem:[%s2] sm:$0x1]
  %v42 = vlaneseq
  %v43 = vshrl.u32 %v42, 7
  %v44 = vsub.s32 0, %v43
  %v45 = vrot.slane %v40, %v44
  %v49 = vunpack.c.l.b16 %v34
  %v50 = vunpack.c.l.b16 %v35
  %v51 = vpack.c.b16 %v50, %v49
  %v56 = vunpack.c.l.b16 %v36
  %v57 = vunpack.c.l.b16 %v37
  %v58 = vunpack.c.l.b16 %v38
  %v59 = vunpack.c.l.b16 %v39
  %v60 = vpack.c.b16 %v57, %v56
  %v61 = vpack.c.b16 %v59, %v58
  %vm64 = vcmask 261120
  %v66 = vsel %vm64, %v51, 0
  %68 = vmatprep.subr.bf16.mxu0 0
  %69 = vmatpush1.bf16.msra.mxu0 %v60
  %70 = vmatprep.subr.bf16.mxu0 0
  %71 = vmatpush1.bf16.msra.mxu0 %v61
  %72 = vmatprep.subr.bf16.mxu0 0
  %73 = vmatpush1.bf16.msra.mxu0 0
  %74 = vmatprep.subr.bf16.mxu0 0
  %75 = vmatpush1.bf16.msra.mxu0 0
  %76 = vmatprep.subr.bf16.mxu0 0
  %77 = vmatpush1.bf16.msra.mxu0 0
  %78 = vmatprep.subr.bf16.mxu0 0
  %79 = vmatpush1.bf16.msra.mxu0 0
  %80 = vmatprep.subr.bf16.mxu0 0
  %81 = vmatpush1.bf16.msra.mxu0 0
  %82 = vmatprep.subr.bf16.mxu0 0
  %83 = vmatpush1.bf16.msra.mxu0 0
  %84 = vmatprep.subr.bf16.mxu0 0
  %85 = vmatpush1.bf16.msra.mxu0 0
  %86 = vmatprep.subr.bf16.mxu0 0
  %87 = vmatpush1.bf16.msra.mxu0 0
  %88 = vmatprep.subr.bf16.mxu0 0
  %89 = vmatpush1.bf16.msra.mxu0 0
  %90 = vmatprep.subr.bf16.mxu0 0
  %91 = vmatpush1.bf16.msra.mxu0 0
  %92 = vmatprep.subr.bf16.mxu0 0
  %93 = vmatpush1.bf16.msra.mxu0 0
  %94 = vmatprep.subr.bf16.mxu0 0
  %95 = vmatpush1.bf16.msra.mxu0 0
  %96 = vmatprep.subr.bf16.mxu0 0
  %97 = vmatpush1.bf16.msra.mxu0 0
  %98 = vmatprep.subr.bf16.mxu0 0
  %99 = vmatpush1.bf16.msra.mxu0 0
  %100 = vmatprep.mubr.bf16.mxu0 0
  %101 = vmatmul.mubr.bf16.gmra.mrb[0].mxu0 %v66
  %v102 = vpop.f32.mrb[0].mxu0
  %v103 = vadd.f32 %v45, %v102
  %v104 = vpop.f32.mrb[0].mxu0
  %v105 = vpop.f32.mrb[0].mxu0
  %v106 = vadd.f32 %v45, %v105
  %v107 = vpop.f32.mrb[0].mxu0
  %108 = vdwg.mxu0
  %v109 = vmul.f32 %v103, 0.5
  %v110 = vmul.f32 %v106, 0.5
  %v111 = vmul.f32 %v103, 0.044715
  %v112 = vmul.f32 %v106, 0.044715
  %v113 = vmul.f32 %v111, %v103
  %v114 = vmul.f32 %v112, %v106
  %v115 = vmul.f32 %v113, %v103
  %v116 = vmul.f32 %v114, %v106
  %v117 = vadd.f32 %v103, %v115
  %v118 = vadd.f32 %v106, %v116
  %v119 = vmul.f32 %v117, 0.7978846
  %v120 = vmul.f32 %v118, 0.7978846
  %v121 = vtanh.pop %v119
  %v122 = vtanh.pop %v120
  %v123 = vadd.f32 %v121, 1.0
  %v124 = vadd.f32 %v122, 1.0
  %v125 = vmul.f32 %v109, %v123
  %v126 = vmul.f32 %v110, %v124
  %v127 = vld [vmem:[#allocation2] sm:$0xff]
  %v128 = vld [vmem:[#allocation2 + $0x8] sm:$0xff]
  %v129 = vpack.c.bf16 %v126, %v125
  %v130 = vld [vmem:[%s3] sm:$0xf]
  %v131 = vld [vmem:[%s3 + $0x4] sm:$0xf]
  %v132 = vld [vmem:[%s3 + $0x8] sm:$0xf]
  %v133 = vld [vmem:[%s3 + $0xc] sm:$0xf]
  %v134 = vld [vmem:[%s3 + $0x10] sm:$0xf]
  %v135 = vld [vmem:[%s3 + $0x14] sm:$0xf]
  %v136 = vld [vmem:[%s3 + $0x18] sm:$0xf]
  %v137 = vld [vmem:[%s3 + $0x1c] sm:$0xf]
  %v146 = vunpack.c.l.b16 %v130
  %v147 = vunpack.c.l.b16 %v131
  %v148 = vunpack.c.l.b16 %v132
  %v149 = vunpack.c.l.b16 %v133
  %v150 = vunpack.c.l.b16 %v134
  %v151 = vunpack.c.l.b16 %v135
  %v152 = vunpack.c.l.b16 %v136
  %v153 = vunpack.c.l.b16 %v137
  %v154 = vpack.c.b16 %v147, %v146
  %v155 = vpack.c.b16 %v149, %v148
  %v156 = vpack.c.b16 %v151, %v150
  %v157 = vpack.c.b16 %v153, %v152
  %vm162 = vcmask 523264
  %v164 = vsel %vm162, %v129, 0
  %166 = vmatprep.subr.bf16.mxu0 0
  %167 = vmatpush1.bf16.msra.mxu0 %v154
  %168 = vmatprep.subr.bf16.mxu0 0
  %169 = vmatpush1.bf16.msra.mxu0 %v155
  %170 = vmatprep.subr.bf16.mxu0 0
  %171 = vmatpush1.bf16.msra.mxu0 %v156
  %172 = vmatprep.subr.bf16.mxu0 0
  %173 = vmatpush1.bf16.msra.mxu0 %v157
  %174 = vmatprep.subr.bf16.mxu0 0
  %175 = vmatpush1.bf16.msra.mxu0 0
  %176 = vmatprep.subr.bf16.mxu0 0
  %177 = vmatpush1.bf16.msra.mxu0 0
  %178 = vmatprep.subr.bf16.mxu0 0
  %179 = vmatpush1.bf16.msra.mxu0 0
  %180 = vmatprep.subr.bf16.mxu0 0
  %181 = vmatpush1.bf16.msra.mxu0 0
  %182 = vmatprep.subr.bf16.mxu0 0
  %183 = vmatpush1.bf16.msra.mxu0 0
  %184 = vmatprep.subr.bf16.mxu0 0
  %185 = vmatpush1.bf16.msra.mxu0 0
  %186 = vmatprep.subr.bf16.mxu0 0
  %187 = vmatpush1.bf16.msra.mxu0 0
  %188 = vmatprep.subr.bf16.mxu0 0
  %189 = vmatpush1.bf16.msra.mxu0 0
  %190 = vmatprep.subr.bf16.mxu0 0
  %191 = vmatpush1.bf16.msra.mxu0 0
  %192 = vmatprep.subr.bf16.mxu0 0
  %193 = vmatpush1.bf16.msra.mxu0 0
  %194 = vmatprep.subr.bf16.mxu0 0
  %195 = vmatpush1.bf16.msra.mxu0 0
  %196 = vmatprep.subr.bf16.mxu0 0
  %197 = vmatpush1.bf16.msra.mxu0 0
  %198 = vmatprep.mubr.bf16.mxu0 0
  %199 = vmatmul.mubr.bf16.gmra.mrb[0].mxu0 %v164
  %v200 = vpop.f32.mrb[0].mxu0
  %v201 = vadd.f32 0.0, %v200
  %v202 = vpop.f32.mrb[0].mxu0
  %v203 = vpop.f32.mrb[0].mxu0
  %v204 = vadd.f32 0.0, %v203
  %v205 = vpop.f32.mrb[0].mxu0
  %206 = vdwg.mxu0
  %v207 = vadd.f32 %v127, %v201
  %v208 = vadd.f32 %v128, %v204
  %209 = vst.msk [vmem:[#allocation2] sm:$0xff] %vm64, %v207
  %210 = vst.msk [vmem:[#allocation2 + $0x8] sm:$0xff] %vm64, %v208
  // Predicated region
  $region34: #{bert_encoder_forward.8} parent=0 // pred_check
    %p211 = pneg %p27
  $region35: #{bert_encoder_forward.8} parent=0 // pred_check_branch
    %213 = sbr.rel (%p211) target = $region37
  $region36: #{bert_encoder_forward.8} parent=0 // pred_region
    %v214 = vld [vmem:[#allocation2] sm:$0xff]
    %v215 = vld [vmem:[#allocation2 + $0x8] sm:$0xff]
    %v216 = vld [vmem:[%s4] sm:$0x1]
    %v218 = vlaneseq
    %v219 = vshrl.u32 %v218, 7
    %v220 = vsub.s32 0, %v219
    %v221 = vrot.slane %v216, %v220
    %v223 = vadd.f32 %v214, %v221
    %v224 = vadd.f32 %v215, %v221
    %v225 = vld [vmem:[%s0] sm:$0xf]
    %v226 = vld [vmem:[%s0 + $0x4] sm:$0xf]
    %v227 = vunpack.c.l.bf16 %v225
    %v228 = vunpack.c.l.bf16 %v226
    %v229 = vadd.f32 %v223, %v227
    %v230 = vadd.f32 %v224, %v228
    %v231 = vld [vmem:[%s5] sm:$0x1]
    %v232 = vld [vmem:[%s6] sm:$0x1]
    %v233 = vsel %vm64, %v229, 0.0
    %234 = vadd.xlane.f32.xlu0 %v233
    %v235 = vpop.xlane.xlu0 %234
    %v236 = vsel %vm64, %v230, 0.0
    %237 = vadd.xlane.f32.xlu0 %v236
    %v238 = vpop.xlane.xlu0 %237
    %v239 = vrcp.pop 32.0
    %v240 = vmul.f32 %v235, %v239
    %v241 = vmul.f32 %v238, %v239
    %v242 = vsub.f32 %v229, %v240
    %v243 = vsub.f32 %v230, %v241
    %v244 = vmul.f32 %v242, %v242
    %v245 = vmul.f32 %v243, %v243
    %v246 = vsel %vm64, %v244, 0.0
    %247 = vadd.xlane.f32.xlu0 %v246
    %v248 = vpop.xlane.xlu0 %247
    %v249 = vsel %vm64, %v245, 0.0
    %250 = vadd.xlane.f32.xlu0 %v249
    %v251 = vpop.xlane.xlu0 %250
    %v252 = vmul.f32 %v248, %v239
    %v253 = vmul.f32 %v251, %v239
    %v254 = vadd.f32 %v252, 1e-12
    %v255 = vadd.f32 %v253, 1e-12
    %v256 = vrsqrt.pop %v254
    %v257 = vrsqrt.pop %v255
    %v258 = vmul.f32 %v242, %v256
    %v259 = vmul.f32 %v243, %v257
    %v261 = vlaneseq
    %v262 = vshrl.u32 %v261, 7
    %v263 = vsub.s32 0, %v262
    %v264 = vrot.slane %v231, %v263
    %v266 = vmul.f32 %v258, %v264
    %v267 = vmul.f32 %v259, %v264
    %v269 = vlaneseq
    %v270 = vshrl.u32 %v269, 7
    %v271 = vsub.s32 0, %v270
    %v272 = vrot.slane %v232, %v271
    %v274 = vadd.f32 %v266, %v272
    %v275 = vadd.f32 %v267, %v272
    %v276 = vpack.c.bf16 %v275, %v274
    %v278 = vunpack.c.l.b16 %v276
    %v279 = vunpack.c.h.b16 %v276
    %v280 = vpack.c.b16 %v278, %v278
    %v281 = vpack.c.b16 %v279, %v279
    %vm284 = vcmask 257024
    %285 = vst.msk [vmem:[%s7] sm:$0xf] %vm284, %v280
    %286 = vst.msk [vmem:[%s7 + $0x4] sm:$0xf] %vm284, %v281
  $region37: #{bert_encoder_forward.8} parent=0 // pred_fallthru
    _
  // Predicated region
  $region38: #{bert_encoder_forward.8} parent=0 // pred_check
    _
  $region39: #{bert_encoder_forward.8} parent=0 // pred_check_branch
    %288 = sbr.rel (0) target = $region41
  $region40: #{bert_encoder_forward.8} parent=0 // pred_region
    _
  $region41: #{bert_encoder_forward.8} parent=0 // pred_fallthru
    _
  // Predicated region
  $region42: #{bert_encoder_forward.8} parent=0 // pred_check
    _
  $region43: #{bert_encoder_forward.8} parent=0 // pred_check_branch
    %290 = sbr.rel (0) target = $region45
  $region44: #{bert_encoder_forward.8} parent=0 // pred_region
    _
  $region45: #{bert_encoder_forward.8} parent=0 // pred_fallthru
    _

// kernel: bert_encoder_forward.7
$region0: #{bert_encoder_forward.7}
  #allocation0 [shape = 'u32[]', space=smem, size = 0x4, offset = 0x4, fixed_abs, tag = 'smem constant byte address 0x4 - core index']
  #allocation1 [shape = 'u32[144,128]{1,0:T(1,128)}', space=vmem, size = 0x12000, scoped, tag = 'internal scratch']
  #allocation2 [shape = 'bf16[8,32]{1,0:T(8,128)(2,1)}', space=vmem, size = 0x800, scoped, tag = 'scratch operand']
  %s0 = inlined_call_operand.vmem [shape: bf16[16,32], index: 0, kind: input, shape index: {}]
  %s1 = inlined_call_operand.vmem [shape: f32[2,1,8], index: 1, kind: input, shape index: {}]
  %s2 = inlined_call_operand.vmem [shape: bf16[32,96], index: 2, kind: input, shape index: {}]
  %s3 = inlined_call_operand.vmem [shape: f32[1,96], index: 3, kind: input, shape index: {}]
  %s4 = inlined_call_operand.vmem [shape: bf16[32,32], index: 4, kind: input, shape index: {}]
  %s5 = inlined_call_operand.vmem [shape: f32[1,32], index: 5, kind: input, shape index: {}]
  %s6 = inlined_call_operand.vmem [shape: f32[1,32], index: 6, kind: input, shape index: {}]
  %s7 = inlined_call_operand.vmem [shape: f32[1,32], index: 7, kind: input, shape index: {}]
  %s8 = inlined_call_operand.vmem [shape: bf16[16,32], index: 8, kind: output, shape index: {}]
  %s9 = sld [smem:[#allocation0]]
  $region65: #{bert_encoder_forward.7} parent=0
    _
  %s11 = ssub.s32 1, %s9
  %s12 = scalar_select 0, %s11, %s9
  loop: start=0, step=1, limit=4
  $region2: #{bert_encoder_forward.7} parent=0 // loop_pre_header
    _
  $region3: #{bert_encoder_forward.7} parent=0 // loop_header
    %s14 = sphi 0, %s18
    %p15 = scmp.ge.s32.totalorder %s14, 4
    %s24 = sphi 0, %s26
    %s27 = sphi 0, %s24
    %s28 = sphi 0, %s27
    %s44 = sphi 0, %s28
    %s50 = sphi 0, %s52
    %s53 = sphi 0, %s50
    %s54 = sphi 0, %s53
    %s70 = sphi 0, %s54
    %s74 = sphi 0, %s74
    %s76 = sphi 0, %s74
    %s77 = sphi 0, %s76
    %s91 = sphi 0, %s77
    %s95 = sphi 0, %s95
    %s97 = sphi 0, %s95
    %s98 = sphi 0, %s97
    %s112 = sphi 0, %s98
    %s116 = sphi 0, %s116
    %s118 = sphi 0, %s116
    %s119 = sphi 0, %s118
    %s133 = sphi 0, %s119
    %s137 = sphi 0, %s137
    %s139 = sphi 0, %s137
    %s140 = sphi 0, %s139
    %s154 = sphi 0, %s140
    %s158 = sphi 0, %s158
    %s160 = sphi 0, %s158
    %s161 = sphi 0, %s160
    %s175 = sphi 0, %s161
    %s179 = sphi 0, %s179
    %s181 = sphi 0, %s179
    %s182 = sphi 0, %s181
    %s196 = sphi 0, %s182
    %s202 = sphi 0, %s204
    %s205 = sphi 0, %s202
    %s206 = sphi 0, %s205
    %s222 = sphi 0, %s206
  $region4: #{bert_encoder_forward.7} parent=0 // loop_header_branch
    %17 = sbr.rel (%p15) target = $region8
  $region5: #{bert_encoder_forward.7} parent=0 // loop_body
    %s19 = ssub.s32 %s14, 1
    %s20 = ssub.s32 %s14, 2
    %s21 = sadd.s32 %s14, 1
    %s22 = ssub.s32 %s14, %s21
    %p23 = scmp.eq.s32.totalorder %s22, 0
    %s25 = sadd.s32 %s24, 1
    %s26 = scalar_select %p23, %s24, %s25
    %p29 = pneg %p23
    %p30 = scmp.eq.s32.totalorder %s14, 1
    %p31 = por %p29, %p30
    %p32 = scmp.ne.s32.totalorder %s24, %s27
    %p33 = scmp.eq.s32.totalorder %s14, 0
    %p34 = por %p32, %p33
    %p35 = scmp.ne.s32.totalorder %s24, %s27
    %p36 = scmp.eq.s32.totalorder %s19, 1
    %p37 = por %p35, %p36
    %p38 = scmp.ne.s32.totalorder %s27, %s28
    %p39 = scmp.eq.s32.totalorder %s19, 0
    %p40 = por %p38, %p39
    %p41 = scmp.ne.s32.totalorder %s27, %s28
    %p42 = scmp.eq.s32.totalorder %s20, 1
    %p43 = por %p41, %p42
    %p45 = scmp.ne.s32.totalorder %s28, %s44
    %p46 = scmp.eq.s32.totalorder %s20, 0
    %p47 = por %p45, %p46
    %s48 = ssub.s32 %s14, %s21
    %p49 = scmp.eq.s32.totalorder %s48, 0
    %s51 = sadd.s32 %s50, 1
    %s52 = scalar_select %p49, %s50, %s51
    %p55 = pneg %p49
    %p56 = scmp.eq.s32.totalorder %s14, 1
    %p57 = por %p55, %p56
    %p58 = scmp.ne.s32.totalorder %s50, %s53
    %p59 = scmp.eq.s32.totalorder %s14, 0
    %p60 = por %p58, %p59
    %p61 = scmp.ne.s32.totalorder %s50, %s53
    %p62 = scmp.eq.s32.totalorder %s19, 1
    %p63 = por %p61, %p62
    %p64 = scmp.ne.s32.totalorder %s53, %s54
    %p65 = scmp.eq.s32.totalorder %s19, 0
    %p66 = por %p64, %p65
    %p67 = scmp.ne.s32.totalorder %s53, %s54
    %p68 = scmp.eq.s32.totalorder %s20, 1
    %p69 = por %p67, %p68
    %p71 = scmp.ne.s32.totalorder %s54, %s70
    %p72 = scmp.eq.s32.totalorder %s20, 0
    %p73 = por %p71, %p72
    %s75 = sadd.s32 %s74, 1
    %p78 = scmp.eq.s32.totalorder %s14, 1
    %p79 = scmp.ne.s32.totalorder %s74, %s76
    %p80 = scmp.eq.s32.totalorder %s14, 0
    %p81 = por %p79, %p80
    %p82 = scmp.ne.s32.totalorder %s74, %s76
    %p83 = scmp.eq.s32.totalorder %s19, 1
    %p84 = por %p82, %p83
    %p85 = scmp.ne.s32.totalorder %s76, %s77
    %p86 = scmp.eq.s32.totalorder %s19, 0
    %p87 = por %p85, %p86
    %p88 = scmp.ne.s32.totalorder %s76, %s77
    %p89 = scmp.eq.s32.totalorder %s20, 1
    %p90 = por %p88, %p89
    %p92 = scmp.ne.s32.totalorder %s77, %s91
    %p93 = scmp.eq.s32.totalorder %s20, 0
    %p94 = por %p92, %p93
    %s96 = sadd.s32 %s95, 1
    %p99 = scmp.eq.s32.totalorder %s14, 1
    %p100 = scmp.ne.s32.totalorder %s95, %s97
    %p101 = scmp.eq.s32.totalorder %s14, 0
    %p102 = por %p100, %p101
    %p103 = scmp.ne.s32.totalorder %s95, %s97
    %p104 = scmp.eq.s32.totalorder %s19, 1
    %p105 = por %p103, %p104
    %p106 = scmp.ne.s32.totalorder %s97, %s98
    %p107 = scmp.eq.s32.totalorder %s19, 0
    %p108 = por %p106, %p107
    %p109 = scmp.ne.s32.totalorder %s97, %s98
    %p110 = scmp.eq.s32.totalorder %s20, 1
    %p111 = por %p109, %p110
    %p113 = scmp.ne.s32.totalorder %s98, %s112
    %p114 = scmp.eq.s32.totalorder %s20, 0
    %p115 = por %p113, %p114
    %s117 = sadd.s32 %s116, 1
    %p120 = scmp.eq.s32.totalorder %s14, 1
    %p121 = scmp.ne.s32.totalorder %s116, %s118
    %p122 = scmp.eq.s32.totalorder %s14, 0
    %p123 = por %p121, %p122
    %p124 = scmp.ne.s32.totalorder %s116, %s118
    %p125 = scmp.eq.s32.totalorder %s19, 1
    %p126 = por %p124, %p125
    %p127 = scmp.ne.s32.totalorder %s118, %s119
    %p128 = scmp.eq.s32.totalorder %s19, 0
    %p129 = por %p127, %p128
    %p130 = scmp.ne.s32.totalorder %s118, %s119
    %p131 = scmp.eq.s32.totalorder %s20, 1
    %p132 = por %p130, %p131
    %p134 = scmp.ne.s32.totalorder %s119, %s133
    %p135 = scmp.eq.s32.totalorder %s20, 0
    %p136 = por %p134, %p135
    %s138 = sadd.s32 %s137, 1
    %p141 = scmp.eq.s32.totalorder %s14, 1
    %p142 = scmp.ne.s32.totalorder %s137, %s139
    %p143 = scmp.eq.s32.totalorder %s14, 0
    %p144 = por %p142, %p143
    %p145 = scmp.ne.s32.totalorder %s137, %s139
    %p146 = scmp.eq.s32.totalorder %s19, 1
    %p147 = por %p145, %p146
    %p148 = scmp.ne.s32.totalorder %s139, %s140
    %p149 = scmp.eq.s32.totalorder %s19, 0
    %p150 = por %p148, %p149
    %p151 = scmp.ne.s32.totalorder %s139, %s140
    %p152 = scmp.eq.s32.totalorder %s20, 1
    %p153 = por %p151, %p152
    %p155 = scmp.ne.s32.totalorder %s140, %s154
    %p156 = scmp.eq.s32.totalorder %s20, 0
    %p157 = por %p155, %p156
    %s159 = sadd.s32 %s158, 1
    %p162 = scmp.eq.s32.totalorder %s14, 1
    %p163 = scmp.ne.s32.totalorder %s158, %s160
    %p164 = scmp.eq.s32.totalorder %s14, 0
    %p165 = por %p163, %p164
    %p166 = scmp.ne.s32.totalorder %s158, %s160
    %p167 = scmp.eq.s32.totalorder %s19, 1
    %p168 = por %p166, %p167
    %p169 = scmp.ne.s32.totalorder %s160, %s161
    %p170 = scmp.eq.s32.totalorder %s19, 0
    %p171 = por %p169, %p170
    %p172 = scmp.ne.s32.totalorder %s160, %s161
    %p173 = scmp.eq.s32.totalorder %s20, 1
    %p174 = por %p172, %p173
    %p176 = scmp.ne.s32.totalorder %s161, %s175
    %p177 = scmp.eq.s32.totalorder %s20, 0
    %p178 = por %p176, %p177
    %s180 = sadd.s32 %s179, 1
    %p183 = scmp.eq.s32.totalorder %s14, 1
    %p184 = scmp.ne.s32.totalorder %s179, %s181
    %p185 = scmp.eq.s32.totalorder %s14, 0
    %p186 = por %p184, %p185
    %p187 = scmp.ne.s32.totalorder %s179, %s181
    %p188 = scmp.eq.s32.totalorder %s19, 1
    %p189 = por %p187, %p188
    %p190 = scmp.ne.s32.totalorder %s181, %s182
    %p191 = scmp.eq.s32.totalorder %s19, 0
    %p192 = por %p190, %p191
    %p193 = scmp.ne.s32.totalorder %s181, %s182
    %p194 = scmp.eq.s32.totalorder %s20, 1
    %p195 = por %p193, %p194
    %p197 = scmp.ne.s32.totalorder %s182, %s196
    %p198 = scmp.eq.s32.totalorder %s20, 0
    %p199 = por %p197, %p198
    %s200 = ssub.s32 %s14, %s21
    %p201 = scmp.eq.s32.totalorder %s200, 0
    %s203 = sadd.s32 %s202, 1
    %s204 = scalar_select %p201, %s202, %s203
    %p207 = pneg %p201
    %p208 = scmp.eq.s32.totalorder %s14, 1
    %p209 = por %p207, %p208
    %p210 = scmp.ne.s32.totalorder %s202, %s205
    %p211 = scmp.eq.s32.totalorder %s14, 0
    %p212 = por %p210, %p211
    %p213 = scmp.ne.s32.totalorder %s202, %s205
    %p214 = scmp.eq.s32.totalorder %s19, 1
    %p215 = por %p213, %p214
    %p216 = scmp.ne.s32.totalorder %s205, %s206
    %p217 = scmp.eq.s32.totalorder %s19, 0
    %p218 = por %p216, %p217
    %p219 = scmp.ne.s32.totalorder %s205, %s206
    %p220 = scmp.eq.s32.totalorder %s20, 1
    %p221 = por %p219, %p220
    %p223 = scmp.ne.s32.totalorder %s206, %s222
    %p224 = scmp.eq.s32.totalorder %s20, 0
    %p225 = por %p223, %p224
    %p226 = scmp.le.s32.totalorder 1, %s14
    %p227 = scmp.lt.s32.totalorder %s14, 3
    %p228 = pnand %p226, %p227
    %p229 = pneg %p228
    // Predicated region
    $region9: #{bert_encoder_forward.7} parent=5 // pred_check
      _
    $region10: #{bert_encoder_forward.7} parent=5 // pred_check_branch
      %231 = sbr.rel (%p228) target = $region12
    $region11: #{bert_encoder_forward.7} parent=5 // pred_region
      %s232 = ssub.s32 %s14, 1
      // Predicated region
      $region13: #{bert_encoder_forward.7} parent=11 // pred_check
        %p233 = pneg %p87
      $region14: #{bert_encoder_forward.7} parent=11 // pred_check_branch
        %235 = sbr.rel (%p233) target = $region16
      $region15: #{bert_encoder_forward.7} parent=11 // pred_region
        _
      $region16: #{bert_encoder_forward.7} parent=11 // pred_fallthru
        _
      // Predicated region
      $region17: #{bert_encoder_forward.7} parent=11 // pred_check
        %p236 = pneg %p108
      $region18: #{bert_encoder_forward.7} parent=11 // pred_check_branch
        %238 = sbr.rel (%p236) target = $region20
      $region19: #{bert_encoder_forward.7} parent=11 // pred_region
        _
      $region20: #{bert_encoder_forward.7} parent=11 // pred_fallthru
        _
      // Predicated region
      $region21: #{bert_encoder_forward.7} parent=11 // pred_check
        %p239 = pneg %p129
      $region22: #{bert_encoder_forward.7} parent=11 // pred_check_branch
        %241 = sbr.rel (%p239) target = $region24
      $region23: #{bert_encoder_forward.7} parent=11 // pred_region
        _
      $region24: #{bert_encoder_forward.7} parent=11 // pred_fallthru
        _
      // Predicated region
      $region25: #{bert_encoder_forward.7} parent=11 // pred_check
        %p242 = pneg %p150
      $region26: #{bert_encoder_forward.7} parent=11 // pred_check_branch
        %244 = sbr.rel (%p242) target = $region28
      $region27: #{bert_encoder_forward.7} parent=11 // pred_region
        _
      $region28: #{bert_encoder_forward.7} parent=11 // pred_fallthru
        _
      // Predicated region
      $region29: #{bert_encoder_forward.7} parent=11 // pred_check
        %p245 = pneg %p171
      $region30: #{bert_encoder_forward.7} parent=11 // pred_check_branch
        %247 = sbr.rel (%p245) target = $region32
      $region31: #{bert_encoder_forward.7} parent=11 // pred_region
        _
      $region32: #{bert_encoder_forward.7} parent=11 // pred_fallthru
        _
      // Predicated region
      $region33: #{bert_encoder_forward.7} parent=11 // pred_check
        %p248 = pneg %p192
      $region34: #{bert_encoder_forward.7} parent=11 // pred_check_branch
        %250 = sbr.rel (%p248) target = $region36
      $region35: #{bert_encoder_forward.7} parent=11 // pred_region
        _
      $region36: #{bert_encoder_forward.7} parent=11 // pred_fallthru
        _
    $region12: #{bert_encoder_forward.7} parent=5 // pred_fallthru
      _
    %p251 = scmp.lt.s32.totalorder %s14, 2
    // Predicated region
    $region37: #{bert_encoder_forward.7} parent=5 // pred_check
      %p252 = pneg %p251
    $region38: #{bert_encoder_forward.7} parent=5 // pred_check_branch
      %254 = sbr.rel (%p252) target = $region40
    $region39: #{bert_encoder_forward.7} parent=5 // pred_region
      // Predicated region
      $region41: #{bert_encoder_forward.7} parent=39 // pred_check
        %p255 = pneg %p34
      $region42: #{bert_encoder_forward.7} parent=39 // pred_check_branch
        %257 = sbr.rel (%p255) target = $region44
      $region43: #{bert_encoder_forward.7} parent=39 // pred_region
        %p258 = scmp.lt.s32.totalorder %s14, 1
        %s259 = scalar_select %p258, %s14, 1
        %s260 = smul.addr %s259, 4
        %s261 = scalar_lea.vmem %s0, %s260
      $region44: #{bert_encoder_forward.7} parent=39 // pred_fallthru
        _
      // Predicated region
      $region45: #{bert_encoder_forward.7} parent=39 // pred_check
        %p262 = pneg %p60
      $region46: #{bert_encoder_forward.7} parent=39 // pred_check_branch
        %264 = sbr.rel (%p262) target = $region48
      $region47: #{bert_encoder_forward.7} parent=39 // pred_region
        %p265 = scmp.lt.s32.totalorder %s14, 1
        %s266 = scalar_select %p265, %s14, 1
        %s267 = scalar_lea.vmem %s1, %s266
      $region48: #{bert_encoder_forward.7} parent=39 // pred_fallthru
        _
    $region40: #{bert_encoder_forward.7} parent=5 // pred_fallthru
      _
    %p268 = scmp.le.s32.totalorder 1, %s14
    %p269 = scmp.lt.s32.totalorder %s14, 3
    %p270 = pnand %p268, %p269
    %p271 = pneg %p270
    // Predicated region
    $region49: #{bert_encoder_forward.7} parent=5 // pred_check
      _
    $region50: #{bert_encoder_forward.7} parent=5 // pred_check_branch
      %273 = sbr.rel (%p270) target = $region52
    $region51: #{bert_encoder_forward.7} parent=5 // pred_region
      %s274 = ssub.s32 %s14, 1
      %p275 = scmp.lt.s32.totalorder %s19, 1
      %s276 = scalar_select %p275, %s19, 1
      %s277 = smul.addr %s276, 4
      %s278 = scalar_lea.vmem %s0, %s277
      %p279 = pneg %p40
      %p280 = pneg %p37
      %p281 = scmp.lt.s32.totalorder %s19, 1
      %s282 = scalar_select %p281, %s19, 1
      %s283 = scalar_lea.vmem %s1, %s282
      %p284 = pneg %p66
      %p285 = pneg %p63
      %p286 = pneg %p87
      %p287 = pneg %p84
      %p288 = pneg %p108
      %p289 = pneg %p105
      %p290 = pneg %p129
      %p291 = pneg %p126
      %p292 = pneg %p150
      %p293 = pneg %p147
      %p294 = pneg %p171
      %p295 = pneg %p168
      %p296 = pneg %p192
      %p297 = pneg %p189
      %p298 = pneg %p218
      %p299 = pneg %p215
      %p300 = scmp.lt.s32.totalorder %s19, 1
      %s301 = scalar_select %p300, %s19, 1
      %s302 = smul.addr %s301, 4
      %s303 = scalar_lea.vmem %s8, %s302
      %p304 = scmp.lt.s32.totalorder %s19, 1
      %s305 = scalar_select %p304, %s19, 1
      %s306 = smul.addr %s305, 4
      %s307 = scalar_lea.vmem %s0, %s306
      %p308 = scmp.lt.s32.totalorder %s19, 1
      %s309 = scalar_select %p308, %s19, 1
      %s310 = scalar_lea.vmem %s1, %s309
      %p311 = scmp.lt.s32.totalorder %s19, 1
      %s312 = scalar_select %p311, %s19, 1
      %s313 = smul.addr %s312, 4
      %s314 = scalar_lea.vmem %s8, %s313
      %v316 = vld [vmem:[%s307] sm:$0xf]
      %v317 = vunpack.c.l.bf16 %v316
      %v318 = vld [vmem:[%s2] sm:$0xf]
      %v319 = vld [vmem:[%s2 + $0x4] sm:$0xf]
      %v320 = vld [vmem:[%s2 + $0x8] sm:$0xf]
      %v321 = vld [vmem:[%s2 + $0xc] sm:$0xf]
      %v322 = vld [vmem:[%s3] sm:$0x1]
      %v324 = vlaneseq
      %v325 = vshrl.u32 %v324, 7
      %v326 = vsub.s32 0, %v325
      %v327 = vrot.slane %v322, %v326
      %v333 = vunpack.c.l.b16 %v318
      %v334 = vunpack.c.l.b16 %v319
      %v335 = vunpack.c.l.b16 %v320
      %v336 = vunpack.c.l.b16 %v321
      %v337 = vpack.c.b16 %v334, %v333
      %v338 = vpack.c.b16 %v336, %v335
      %vm341 = vcmask 261120
      %v343 = vsel %vm341, %v316, 0
      %345 = vmatprep.subr.bf16.mxu0 0
      %346 = vmatpush1.bf16.msra.mxu0 %v337
      %347 = vmatprep.subr.bf16.mxu0 0
      %348 = vmatpush1.bf16.msra.mxu0 %v338
      %349 = vmatprep.subr.bf16.mxu0 0
      %350 = vmatpush1.bf16.msra.mxu0 0
      %351 = vmatprep.subr.bf16.mxu0 0
      %352 = vmatpush1.bf16.msra.mxu0 0
      %353 = vmatprep.subr.bf16.mxu0 0
      %354 = vmatpush1.bf16.msra.mxu0 0
      %355 = vmatprep.subr.bf16.mxu0 0
      %356 = vmatpush1.bf16.msra.mxu0 0
      %357 = vmatprep.subr.bf16.mxu0 0
      %358 = vmatpush1.bf16.msra.mxu0 0
      %359 = vmatprep.subr.bf16.mxu0 0
      %360 = vmatpush1.bf16.msra.mxu0 0
      %361 = vmatprep.subr.bf16.mxu0 0
      %362 = vmatpush1.bf16.msra.mxu0 0
      %363 = vmatprep.subr.bf16.mxu0 0
      %364 = vmatpush1.bf16.msra.mxu0 0
      %365 = vmatprep.subr.bf16.mxu0 0
      %366 = vmatpush1.bf16.msra.mxu0 0
      %367 = vmatprep.subr.bf16.mxu0 0
      %368 = vmatpush1.bf16.msra.mxu0 0
      %369 = vmatprep.subr.bf16.mxu0 0
      %370 = vmatpush1.bf16.msra.mxu0 0
      %371 = vmatprep.subr.bf16.mxu0 0
      %372 = vmatpush1.bf16.msra.mxu0 0
      %373 = vmatprep.subr.bf16.mxu0 0
      %374 = vmatpush1.bf16.msra.mxu0 0
      %375 = vmatprep.subr.bf16.mxu0 0
      %376 = vmatpush1.bf16.msra.mxu0 0
      %377 = vmatprep.mubr.bf16.mxu0 0
      %378 = vmatmul.mubr.bf16.gmra.mrb[0].mxu0 %v343
      %v379 = vpop.f32.mrb[0].mxu0
      %v380 = vadd.f32 %v327, %v379
      %v381 = vpop.f32.mrb[0].mxu0
      %v382 = vpop.f32.mrb[0].mxu0
      %v383 = vpop.f32.mrb[0].mxu0
      %384 = vdwg.mxu0
      %v385 = vpack.c.bf16 %v380, %v380
      %v386 = vld [vmem:[%s310] sm:$0x1]
      %388 = vrot.lane.b32.xlu0 %v385, 96
      %v389 = vpop.permute.xlu0 %388
      %vm390 = vcmask 130048
      %v392 = vsel %vm390, %v385, 0
      %v395 = vsel %vm390, %v389, 0
      %397 = vmatprep.subr.bf16.mxu0 0
      %398 = vmatpush1.bf16.xpose.msra.mxu0 %v395
      %399 = vmatprep.subr.bf16.mxu0 0
      %400 = vmatpush1.bf16.xpose.msra.mxu0 0
      %401 = vmatprep.subr.bf16.mxu0 0
      %402 = vmatpush1.bf16.xpose.msra.mxu0 0
      %403 = vmatprep.subr.bf16.mxu0 0
      %404 = vmatpush1.bf16.xpose.msra.mxu0 0
      %405 = vmatprep.subr.bf16.mxu0 0
      %406 = vmatpush1.bf16.xpose.msra.mxu0 0
      %407 = vmatprep.subr.bf16.mxu0 0
      %408 = vmatpush1.bf16.xpose.msra.mxu0 0
      %409 = vmatprep.subr.bf16.mxu0 0
      %410 = vmatpush1.bf16.xpose.msra.mxu0 0
      %411 = vmatprep.subr.bf16.mxu0 0
      %412 = vmatpush1.bf16.xpose.msra.mxu0 0
      %413 = vmatprep.subr.bf16.mxu0 0
      %414 = vmatpush1.bf16.xpose.msra.mxu0 0
      %415 = vmatprep.subr.bf16.mxu0 0
      %416 = vmatpush1.bf16.xpose.msra.mxu0 0
      %417 = vmatprep.subr.bf16.mxu0 0
      %418 = vmatpush1.bf16.xpose.msra.mxu0 0
      %419 = vmatprep.subr.bf16.mxu0 0
      %420 = vmatpush1.bf16.xpose.msra.mxu0 0
      %421 = vmatprep.subr.bf16.mxu0 0
      %422 = vmatpush1.bf16.xpose.msra.mxu0 0
      %423 = vmatprep.subr.bf16.mxu0 0
      %424 = vmatpush1.bf16.xpose.msra.mxu0 0
      %425 = vmatprep.subr.bf16.mxu0 0
      %426 = vmatpush1.bf16.xpose.msra.mxu0 0
      %427 = vmatprep.subr.bf16.mxu0 0
      %428 = vmatpush1.bf16.xpose.msra.mxu0 0
      %429 = vmatprep.mubr.bf16.mxu0 0
      %430 = vmatmul.mubr.bf16.gmra.mrb[0].mxu0 %v392
      %v431 = vpop.f32.mrb[0].mxu0
      %v432 = vadd.f32 0.0, %v431
      %v433 = vpop.f32.mrb[0].mxu0
      %v434 = vpop.f32.mrb[0].mxu0
      %v435 = vpop.f32.mrb[0].mxu0
      %436 = vdwg.mxu0
      %v437 = vmul.f32 %v432, 0.25
      %v439 = vlaneseq
      %v440 = vshrl.u32 %v439, 7
      %v441 = vsub.s32 0, %v440
      %v442 = vrot.slane %v386, %v441
      %v444 = vadd.f32 %v437, %v442
      %vm445 = vcmask 64512
      %v446 = vsel %vm445, %v444, -inf
      %447 = vmax.xlane.f32.xlu0 %v446
      %v448 = vpop.xlane.xlu0 %447
      %v449 = vsub.f32 %v444, %v448
      %v450 = vmul.f32 %v449, 1.442695
      %v451 = vpow.pop %v450
      %v452 = vsel %vm445, %v451, 0.0
      %453 = vadd.xlane.f32.xlu0 %v452
      %v454 = vpop.xlane.xlu0 %453
      %v455 = vrcp.pop %v454
      %v456 = vmul.f32 %v451, %v455
      %v457 = vpack.c.bf16 %v456, %v456
      %458 = vrot.lane.b32.xlu0 %v385, 64
      %v459 = vpop.permute.xlu0 %458
      %v461 = vsel %vm445, %v457, 0
      %vm463 = vcmask 1043456
      %v465 = vsel %vm463, %v459, 0
      %467 = vmatprep.subr.bf16.mxu0 0
      %468 = vmatpush1.bf16.msra.mxu0 %v465
      %469 = vmatprep.subr.bf16.mxu0 0
      %470 = vmatpush1.bf16.msra.mxu0 0
      %471 = vmatprep.subr.bf16.mxu0 0
      %472 = vmatpush1.bf16.msra.mxu0 0
      %473 = vmatprep.subr.bf16.mxu0 0
      %474 = vmatpush1.bf16.msra.mxu0 0
      %475 = vmatprep.subr.bf16.mxu0 0
      %476 = vmatpush1.bf16.msra.mxu0 0
      %477 = vmatprep.subr.bf16.mxu0 0
      %478 = vmatpush1.bf16.msra.mxu0 0
      %479 = vmatprep.subr.bf16.mxu0 0
      %480 = vmatpush1.bf16.msra.mxu0 0
      %481 = vmatprep.subr.bf16.mxu0 0
      %482 = vmatpush1.bf16.msra.mxu0 0
      %483 = vmatprep.subr.bf16.mxu0 0
      %484 = vmatpush1.bf16.msra.mxu0 0
      %485 = vmatprep.subr.bf16.mxu0 0
      %486 = vmatpush1.bf16.msra.mxu0 0
      %487 = vmatprep.subr.bf16.mxu0 0
      %488 = vmatpush1.bf16.msra.mxu0 0
      %489 = vmatprep.subr.bf16.mxu0 0
      %490 = vmatpush1.bf16.msra.mxu0 0
      %491 = vmatprep.subr.bf16.mxu0 0
      %492 = vmatpush1.bf16.msra.mxu0 0
      %493 = vmatprep.subr.bf16.mxu0 0
      %494 = vmatpush1.bf16.msra.mxu0 0
      %495 = vmatprep.subr.bf16.mxu0 0
      %496 = vmatpush1.bf16.msra.mxu0 0
      %497 = vmatprep.subr.bf16.mxu0 0
      %498 = vmatpush1.bf16.msra.mxu0 0
      %499 = vmatprep.mubr.bf16.mxu0 0
      %500 = vmatmul.mubr.bf16.gmra.mrb[0].mxu0 %v461
      %v501 = vpop.f32.mrb[0].mxu0
      %v502 = vadd.f32 0.0, %v501
      %v503 = vpop.f32.mrb[0].mxu0
      %v504 = vpop.f32.mrb[0].mxu0
      %v505 = vpop.f32.mrb[0].mxu0
      %506 = vdwg.mxu0
      %v507 = vpack.c.bf16 %v502, %v502
      %vm508 = vcmask 125952
      %509 = vst.msk [vmem:[#allocation2] sm:$0xf] %vm508, %v507
      %510 = vrot.lane.b32.xlu0 %v385, 112
      %v511 = vpop.permute.xlu0 %510
      %512 = vrot.lane.b32.xlu0 %v385, 80
      %v513 = vpop.permute.xlu0 %512
      %v515 = vsel %vm390, %v511, 0
      %v518 = vsel %vm390, %v513, 0
      %520 = vmatprep.subr.bf16.mxu0 0
      %521 = vmatpush1.bf16.xpose.msra.mxu0 %v518
      %522 = vmatprep.subr.bf16.mxu0 0
      %523 = vmatpush1.bf16.xpose.msra.mxu0 0
      %524 = vmatprep.subr.bf16.mxu0 0
      %525 = vmatpush1.bf16.xpose.msra.mxu0 0
      %526 = vmatprep.subr.bf16.mxu0 0
      %527 = vmatpush1.bf16.xpose.msra.mxu0 0
      %528 = vmatprep.subr.bf16.mxu0 0
      %529 = vmatpush1.bf16.xpose.msra.mxu0 0
      %530 = vmatprep.subr.bf16.mxu0 0
      %531 = vmatpush1.bf16.xpose.msra.mxu0 0
      %532 = vmatprep.subr.bf16.mxu0 0
      %533 = vmatpush1.bf16.xpose.msra.mxu0 0
      %534 = vmatprep.subr.bf16.mxu0 0
      %535 = vmatpush1.bf16.xpose.msra.mxu0 0
      %536 = vmatprep.subr.bf16.mxu0 0
      %537 = vmatpush1.bf16.xpose.msra.mxu0 0
      %538 = vmatprep.subr.bf16.mxu0 0
      %539 = vmatpush1.bf16.xpose.msra.mxu0 0
      %540 = vmatprep.subr.bf16.mxu0 0
      %541 = vmatpush1.bf16.xpose.msra.mxu0 0
      %542 = vmatprep.subr.bf16.mxu0 0
      %543 = vmatpush1.bf16.xpose.msra.mxu0 0
      %544 = vmatprep.subr.bf16.mxu0 0
      %545 = vmatpush1.bf16.xpose.msra.mxu0 0
      %546 = vmatprep.subr.bf16.mxu0 0
      %547 = vmatpush1.bf16.xpose.msra.mxu0 0
      %548 = vmatprep.subr.bf16.mxu0 0
      %549 = vmatpush1.bf16.xpose.msra.mxu0 0
      %550 = vmatprep.subr.bf16.mxu0 0
      %551 = vmatpush1.bf16.xpose.msra.mxu0 0
      %552 = vmatprep.mubr.bf16.mxu0 0
      %553 = vmatmul.mubr.bf16.gmra.mrb[0].mxu0 %v515
      %v554 = vpop.f32.mrb[0].mxu0
      %v555 = vadd.f32 0.0, %v554
      %v556 = vpop.f32.mrb[0].mxu0
      %v557 = vpop.f32.mrb[0].mxu0
      %v558 = vpop.f32.mrb[0].mxu0
      %559 = vdwg.mxu0
      %v560 = vmul.f32 %v555, 0.25
      %v561 = vadd.f32 %v560, %v442
      %v562 = vsel %vm445, %v561, -inf
      %563 = vmax.xlane.f32.xlu0 %v562
      %v564 = vpop.xlane.xlu0 %563
      %v565 = vsub.f32 %v561, %v564
      %v566 = vmul.f32 %v565, 1.442695
      %v567 = vpow.pop %v566
      %v568 = vsel %vm445, %v567, 0.0
      %569 = vadd.xlane.f32.xlu0 %v568
      %v570 = vpop.xlane.xlu0 %569
      %v571 = vrcp.pop %v570
      %v572 = vmul.f32 %v567, %v571
      %v573 = vpack.c.bf16 %v572, %v572
      %574 = vrot.lane.b32.xlu0 %v385, 48
      %v575 = vpop.permute.xlu0 %574
      %v577 = vsel %vm445, %v573, 0
      %v580 = vsel %vm463, %v575, 0
      %582 = vmatprep.subr.bf16.mxu0 0
      %583 = vmatpush1.bf16.msra.mxu0 %v580
      %584 = vmatprep.subr.bf16.mxu0 0
      %585 = vmatpush1.bf16.msra.mxu0 0
      %586 = vmatprep.subr.bf16.mxu0 0
      %587 = vmatpush1.bf16.msra.mxu0 0
      %588 = vmatprep.subr.bf16.mxu0 0
      %589 = vmatpush1.bf16.msra.mxu0 0
      %590 = vmatprep.subr.bf16.mxu0 0
      %591 = vmatpush1.bf16.msra.mxu0 0
      %592 = vmatprep.subr.bf16.mxu0 0
      %593 = vmatpush1.bf16.msra.mxu0 0
      %594 = vmatprep.subr.bf16.mxu0 0
      %595 = vmatpush1.bf16.msra.mxu0 0
      %596 = vmatprep.subr.bf16.mxu0 0
      %597 = vmatpush1.bf16.msra.mxu0 0
      %598 = vmatprep.subr.bf16.mxu0 0
      %599 = vmatpush1.bf16.msra.mxu0 0
      %600 = vmatprep.subr.bf16.mxu0 0
      %601 = vmatpush1.bf16.msra.mxu0 0
      %602 = vmatprep.subr.bf16.mxu0 0
      %603 = vmatpush1.bf16.msra.mxu0 0
      %604 = vmatprep.subr.bf16.mxu0 0
      %605 = vmatpush1.bf16.msra.mxu0 0
      %606 = vmatprep.subr.bf16.mxu0 0
      %607 = vmatpush1.bf16.msra.mxu0 0
      %608 = vmatprep.subr.bf16.mxu0 0
      %609 = vmatpush1.bf16.msra.mxu0 0
      %610 = vmatprep.subr.bf16.mxu0 0
      %611 = vmatpush1.bf16.msra.mxu0 0
      %612 = vmatprep.subr.bf16.mxu0 0
      %613 = vmatpush1.bf16.msra.mxu0 0
      %614 = vmatprep.mubr.bf16.mxu0 0
      %615 = vmatmul.mubr.bf16.gmra.mrb[0].mxu0 %v577
      %v616 = vpop.f32.mrb[0].mxu0
      %v617 = vadd.f32 0.0, %v616
      %v618 = vpop.f32.mrb[0].mxu0
      %v619 = vpop.f32.mrb[0].mxu0
      %v620 = vpop.f32.mrb[0].mxu0
      %621 = vdwg.mxu0
      %v622 = vpack.c.bf16 %v617, %v617
      %v624 = vunpack.c.l.b16 %v622
      %v625 = vpack.c.b16 %v624, %v624
      %626 = vrot.lane.b32.xlu0 %v625, 16
      %v627 = vpop.permute.xlu0 %626
      %vm629 = vcmask 257152
      %630 = vst.msk [vmem:[#allocation2] sm:$0xf] %vm629, %v627
      %v631 = vld [vmem:[#allocation2] sm:$0xf]
      %v632 = vld [vmem:[%s4] sm:$0xf]
      %v633 = vld [vmem:[%s4 + $0x4] sm:$0xf]
      %v634 = vld [vmem:[%s4 + $0x8] sm:$0xf]
      %v635 = vld [vmem:[%s4 + $0xc] sm:$0xf]
      %v636 = vld [vmem:[%s5] sm:$0x1]
      %v638 = vlaneseq
      %v639 = vshrl.u32 %v638, 7
      %v640 = vsub.s32 0, %v639
      %v641 = vrot.slane %v636, %v640
      %v647 = vunpack.c.l.b16 %v632
      %v648 = vunpack.c.l.b16 %v633
      %v649 = vunpack.c.l.b16 %v634
      %v650 = vunpack.c.l.b16 %v635
      %v651 = vpack.c.b16 %v648, %v647
      %v652 = vpack.c.b16 %v650, %v649
      %v656 = vsel %vm341, %v631, 0
      %658 = vmatprep.subr.bf16.mxu0 0
      %659 = vmatpush1.bf16.msra.mxu0 %v651
      %660 = vmatprep.subr.bf16.mxu0 0
      %661 = vmatpush1.bf16.msra.mxu0 %v652
      %662 = vmatprep.subr.bf16.mxu0 0
      %663 = vmatpush1.bf16.msra.mxu0 0
      %664 = vmatprep.subr.bf16.mxu0 0
      %665 = vmatpush1.bf16.msra.mxu0 0
      %666 = vmatprep.subr.bf16.mxu0 0
      %667 = vmatpush1.bf16.msra.mxu0 0
      %668 = vmatprep.subr.bf16.mxu0 0
      %669 = vmatpush1.bf16.msra.mxu0 0
      %670 = vmatprep.subr.bf16.mxu0 0
      %671 = vmatpush1.bf16.msra.mxu0 0
      %672 = vmatprep.subr.bf16.mxu0 0
      %673 = vmatpush1.bf16.msra.mxu0 0
      %674 = vmatprep.subr.bf16.mxu0 0
      %675 = vmatpush1.bf16.msra.mxu0 0
      %676 = vmatprep.subr.bf16.mxu0 0
      %677 = vmatpush1.bf16.msra.mxu0 0
      %678 = vmatprep.subr.bf16.mxu0 0
      %679 = vmatpush1.bf16.msra.mxu0 0
      %680 = vmatprep.subr.bf16.mxu0 0
      %681 = vmatpush1.bf16.msra.mxu0 0
      %682 = vmatprep.subr.bf16.mxu0 0
      %683 = vmatpush1.bf16.msra.mxu0 0
      %684 = vmatprep.subr.bf16.mxu0 0
      %685 = vmatpush1.bf16.msra.mxu0 0
      %686 = vmatprep.subr.bf16.mxu0 0
      %687 = vmatpush1.bf16.msra.mxu0 0
      %688 = vmatprep.subr.bf16.mxu0 0
      %689 = vmatpush1.bf16.msra.mxu0 0
      %690 = vmatprep.mubr.bf16.mxu0 0
      %691 = vmatmul.mubr.bf16.gmra.mrb[0].mxu0 %v656
      %v692 = vpop.f32.mrb[0].mxu0
      %v693 = vadd.f32 %v641, %v692
      %v694 = vpop.f32.mrb[0].mxu0
      %v695 = vpop.f32.mrb[0].mxu0
      %v696 = vpop.f32.mrb[0].mxu0
      %697 = vdwg.mxu0
      %v698 = vadd.f32 %v693, %v317
      %v699 = vld [vmem:[%s6] sm:$0x1]
      %v700 = vld [vmem:[%s7] sm:$0x1]
      %v701 = vsel %vm341, %v698, 0.0
      %702 = vadd.xlane.f32.xlu0 %v701
      %v703 = vpop.xlane.xlu0 %702
      %v704 = vrcp.pop 32.0
      %v705 = vmul.f32 %v703, %v704
      %v706 = vsub.f32 %v698, %v705
      %v707 = vmul.f32 %v706, %v706
      %v708 = vsel %vm341, %v707, 0.0
      %709 = vadd.xlane.f32.xlu0 %v708
      %v710 = vpop.xlane.xlu0 %709
      %v711 = vmul.f32 %v710, %v704
      %v712 = vadd.f32 %v711, 1e-12
      %v713 = vrsqrt.pop %v712
      %v714 = vmul.f32 %v706, %v713
      %v716 = vlaneseq
      %v717 = vshrl.u32 %v716, 7
      %v718 = vsub.s32 0, %v717
      %v719 = vrot.slane %v699, %v718
      %v721 = vmul.f32 %v714, %v719
      %v723 = vlaneseq
      %v724 = vshrl.u32 %v723, 7
      %v725 = vsub.s32 0, %v724
      %v726 = vrot.slane %v700, %v725
      %v728 = vadd.f32 %v721, %v726
      %v729 = vpack.c.bf16 %v728, %v728
      %vm730 = vcmask 257024
      %731 = vst.msk [vmem:[%s314] sm:$0xf] %vm730, %v729
      %p732 = scmp.lt.s32.totalorder %s19, 1
      %s733 = scalar_select %p732, %s19, 1
      %s734 = smul.addr %s733, 4
      %s735 = scalar_lea.vmem %s8, %s734
      // Predicated region
      $region53: #{bert_encoder_forward.7} parent=51 // pred_check
        %p736 = pneg %p215
      $region54: #{bert_encoder_forward.7} parent=51 // pred_check_branch
        %738 = sbr.rel (%p736) target = $region56
      $region55: #{bert_encoder_forward.7} parent=51 // pred_region
        _
      $region56: #{bert_encoder_forward.7} parent=51 // pred_fallthru
        _
    $region52: #{bert_encoder_forward.7} parent=5 // pred_fallthru
      _
    %p739 = scmp.le.s32.totalorder 2, %s14
    // Predicated region
    $region57: #{bert_encoder_forward.7} parent=5 // pred_check
      %p740 = pneg %p739
    $region58: #{bert_encoder_forward.7} parent=5 // pred_check_branch
      %742 = sbr.rel (%p740) target = $region60
    $region59: #{bert_encoder_forward.7} parent=5 // pred_region
      %s743 = ssub.s32 %s14, 2
      // Predicated region
      $region61: #{bert_encoder_forward.7} parent=59 // pred_check
        %p744 = pneg %p221
      $region62: #{bert_encoder_forward.7} parent=59 // pred_check_branch
        %746 = sbr.rel (%p744) target = $region64
      $region63: #{bert_encoder_forward.7} parent=59 // pred_region
        %p747 = scmp.lt.s32.totalorder %s20, 1
        %s748 = scalar_select %p747, %s20, 1
        %s749 = smul.addr %s748, 4
        %s750 = scalar_lea.vmem %s8, %s749
      $region64: #{bert_encoder_forward.7} parent=59 // pred_fallthru
        _
    $region60: #{bert_encoder_forward.7} parent=5 // pred_fallthru
      _
  $region6: #{bert_encoder_forward.7} parent=0 // loop_footer
    %s18 = sadd.s32 1, %s14
  $region7: #{bert_encoder_forward.7} parent=0 // loop_footer_branch
    %13 = sbr.rel target = $region3
  $region8: #{bert_encoder_forward.7} parent=0 // loop_exit
    _

</llo_original>
